<compile_context>
chip_gen: v7x
topology: tpu7x:2x2x1
jax: 0.10.0
libtpu: 0.0.40
codegen_flags: <defaults>
</compile_context>

<pallas_src>
import jax
import jax.numpy as jnp
from jax.experimental import pallas as pl
from jax.experimental.pallas import tpu as pltpu
import numpy as np


def resblock_kernel(x_ref, w1_ref, b1_ref, w2_ref, b2_ref, wr_ref, o_ref,
                    xcol_ref, hcol_ref):
    # x_ref   : (1, H, W, Cin)       bf16   one batch image
    # w1_ref  : (3, 3*Cin, Cmid)     bf16   conv1 weight (dy, dx*Cin + c, cmid), BN1 folded
    # b1_ref  : (1, Cmid)            f32    folded BN1 bias
    # w2_ref  : (3, 3*Cmid, Cout)    bf16   conv2 weight, BN2 folded
    # b2_ref  : (1, Cout)            f32    folded BN2 bias
    # wr_ref  : (3*Cin, Cout)        bf16   1x1 residual weight embedded in the dx=0 block
    # o_ref   : (1, H, W, Cout)      f32
    # xcol_ref: (H+2, W, 3*Cin)      bf16   dx-im2col of the zero-padded input
    # hcol_ref: (H+2, W, 3*Cmid)     bf16   dx-im2col of the zero-padded hidden map
    _, H, W, Cin = x_ref.shape
    Cmid = w1_ref.shape[2]
    Cout = w2_ref.shape[2]
    f32 = jnp.float32
    cdt = xcol_ref.dtype

    def build_col(col_ref, v, c):
        # col_ref[r, w, k*c:(k+1)*c] == vpad[r, w + k, :]  (vpad = zero-pad(v) by 1).
        # Built in registers and written with a single full, lane-dense store;
        # the zero halo (rows 0 / H+1 and the edge columns of the dx=+-1 taps)
        # is part of the stored value, so no separate scratch zero-fill pass.
        zc = jnp.zeros((H, 1, c), cdt)
        left = jnp.concatenate([zc, v[:, :W - 1, :]], axis=1)     # vpad[1:H+1, w,   :]
        right = jnp.concatenate([v[:, 1:, :], zc], axis=1)        # vpad[1:H+1, w+2, :]
        body = jnp.concatenate([left, v, right], axis=-1)         # (H, W, 3*c)
        zrow = jnp.zeros((1, W, 3 * c), cdt)
        col_ref[...] = jnp.concatenate([zrow, body, zrow], axis=0)

    # ---- conv3x3 #1 (+ folded BN1) + ReLU, and the 1x1 residual path ----
    build_col(xcol_ref, x_ref[0], Cin)
    acc1 = jnp.zeros((H * W, Cmid), f32)
    res = None
    for dy in range(3):                      # static 3-tap unroll, K = 3*Cin
        # Leading-axis slice only (no sublane/lane offset) -> no VMEM copy.
        patch = xcol_ref[dy:dy + H].reshape(H * W, 3 * Cin)
        acc1 = acc1 + jnp.dot(patch, w1_ref[dy], preferred_element_type=f32)
        if dy == 1:                          # center rows == the un-padded input
            res = jnp.dot(patch, wr_ref[...], preferred_element_type=f32)
    h = jnp.maximum(acc1 + b1_ref[...], 0.0)                 # f32 epilogue
    hb = h.astype(cdt).reshape(H, W, Cmid)                    # bf16 for the MXU

    # ---- conv3x3 #2 (+ folded BN2) + residual + ReLU ----
    build_col(hcol_ref, hb, Cmid)
    acc2 = jnp.zeros((H * W, Cout), f32)
    for dy in range(3):
        patch = hcol_ref[dy:dy + H].reshape(H * W, 3 * Cmid)
        acc2 = acc2 + jnp.dot(patch, w2_ref[dy], preferred_element_type=f32)

    out = jnp.maximum(acc2 + b2_ref[...] + res, 0.0)
    o_ref[0] = out.reshape(H, W, Cout)


@jax.jit
def residual_block_forward(x_nchw, kparams):
    """ResidualBlock forward. Input/output are NCHW f32 (PyTorch layout)."""
    x = jnp.transpose(x_nchw, (0, 2, 3, 1)).astype(jnp.bfloat16)   # NHWC, bf16
    N, H, W, Cin = x.shape
    Cmid = kparams["w1_k"].shape[2]
    Cout = kparams["w2_k"].shape[2]

    out = pl.pallas_call(
        resblock_kernel,
        out_shape=jax.ShapeDtypeStruct((N, H, W, Cout), jnp.float32),
        grid=(N,),
        in_specs=[
            pl.BlockSpec((1, H, W, Cin), lambda n: (n, 0, 0, 0)),
            pl.BlockSpec((3, 3 * Cin, Cmid), lambda n: (0, 0, 0)),
            pl.BlockSpec((1, Cmid), lambda n: (0, 0)),
            pl.BlockSpec((3, 3 * Cmid, Cout), lambda n: (0, 0, 0)),
            pl.BlockSpec((1, Cout), lambda n: (0, 0)),
            pl.BlockSpec((3 * Cin, Cout), lambda n: (0, 0)),
        ],
        out_specs=pl.BlockSpec((1, H, W, Cout), lambda n: (n, 0, 0, 0)),
        scratch_shapes=[
            pltpu.VMEM((H + 2, W, 3 * Cin), jnp.bfloat16),    # dx-im2col of x
            pltpu.VMEM((H + 2, W, 3 * Cmid), jnp.bfloat16),   # dx-im2col of h
        ],
        compiler_params=pltpu.CompilerParams(
            dimension_semantics=("parallel",),
            # Explicit VMEM budget (scoped default is only 16/32 MiB); kept
            # below v7x's 64 MiB physical per-core VMEM.
            vmem_limit_bytes=48 * 1024 * 1024,
        ),
    )(x, kparams["w1_k"], kparams["b1_k"], kparams["w2_k"], kparams["b2_k"],
      kparams["wr_k"])

    return jnp.transpose(out, (0, 3, 1, 2))                      # back to NCHW


# -----------------------------------------------------------------------------
# Parameter construction (PyTorch shapes) + eval-mode BN folding + kernel layout.
# -----------------------------------------------------------------------------
def make_params(key, in_channels, out_channels):
    eps = 1e-5
    Cin = in_channels
    Cmid = out_channels            # DoubleConv mid_channels defaults to out_channels
    Cout = out_channels

    ks = jax.random.split(key, 11)
    w_c1 = 0.1 * jax.random.normal(ks[0], (Cmid, Cin, 3, 3), jnp.float32)   # OIHW
    w_c2 = 0.1 * jax.random.normal(ks[1], (Cout, Cmid, 3, 3), jnp.float32)
    w_1x1 = 0.1 * jax.random.normal(ks[2], (Cout, Cin, 1, 1), jnp.float32)
    g1 = 1.0 + 0.1 * jax.random.normal(ks[3], (Cmid,), jnp.float32)
    be1 = 0.1 * jax.random.normal(ks[4], (Cmid,), jnp.float32)
    m1 = 0.1 * jax.random.normal(ks[5], (Cmid,), jnp.float32)
    v1 = jax.random.uniform(ks[6], (Cmid,), jnp.float32, minval=0.5, maxval=1.5)
    g2 = 1.0 + 0.1 * jax.random.normal(ks[7], (Cout,), jnp.float32)
    be2 = 0.1 * jax.random.normal(ks[8], (Cout,), jnp.float32)
    m2 = 0.1 * jax.random.normal(ks[9], (Cout,), jnp.float32)
    v2 = jax.random.uniform(ks[10], (Cout,), jnp.float32, minval=0.5, maxval=1.5)

    # Fold eval-mode BN into the bias-free 3x3 convs.
    s1 = g1 / jnp.sqrt(v1 + eps)
    w1f = w_c1 * s1[:, None, None, None]
    b1f = be1 - m1 * s1
    s2 = g2 / jnp.sqrt(v2 + eps)
    w2f = w_c2 * s2[:, None, None, None]
    b2f = be2 - m2 * s2

    # Kernel layouts: (dy, dx*C + c, C_out), matching the dx-im2col scratch.
    w1_k = jnp.transpose(w1f, (2, 3, 1, 0)).reshape(3, 3 * Cin, Cmid)
    w2_k = jnp.transpose(w2f, (2, 3, 1, 0)).reshape(3, 3 * Cmid, Cout)
    # 1x1 residual weight embedded in the dx=0 (center) block of the K axis,
    # so the residual matmul reuses the xcol scratch (x is read only once).
    wr = jnp.transpose(w_1x1[:, :, 0, 0])                        # (Cin, Cout)
    wr_k = jnp.zeros((3 * Cin, Cout), jnp.float32).at[Cin:2 * Cin, :].set(wr)

    kparams = {
        "w1_k": w1_k.astype(jnp.bfloat16), "b1_k": b1f.reshape(1, Cmid),
        "w2_k": w2_k.astype(jnp.bfloat16), "b2_k": b2f.reshape(1, Cout),
        "wr_k": wr_k.astype(jnp.bfloat16),
    }
    raw = {
        "w_c1": w_c1, "w_c2": w_c2, "w_1x1": w_1x1,
        "g1": g1, "be1": be1, "m1": m1, "v1": v1,
        "g2": g2, "be2": be2, "m2": m2, "v2": v2,
    }
    return kparams, raw


# Pure-JAX NCHW reference mirroring the PyTorch forward (eval-mode BN).
def ref_forward(x, p):
    eps = 1e-5

    def conv(a, w, pad):
        return jax.lax.conv_general_dilated(
            a, w, (1, 1), pad, dimension_numbers=("NCHW", "OIHW", "NCHW"))

    def bn(a, g, b, m, v):
        return ((a - m[None, :, None, None])
                / jnp.sqrt(v[None, :, None, None] + eps)
                * g[None, :, None, None] + b[None, :, None, None])

    res = conv(x, p["w_1x1"], "VALID")
    h = jnp.maximum(bn(conv(x, p["w_c1"], "SAME"),
                       p["g1"], p["be1"], p["m1"], p["v1"]), 0.0)
    h = bn(conv(h, p["w_c2"], "SAME"), p["g2"], p["be2"], p["m2"], p["v2"])
    return jnp.maximum(h + res, 0.0)


if __name__ == "__main__":
    in_channels, out_channels = 8, 8
    N, H, W = 2, 16, 16
    key = jax.random.PRNGKey(0)
    kx, kp = jax.random.split(key)

    x = jax.random.normal(kx, (N, in_channels, H, W), jnp.float32)
    kparams, raw = make_params(kp, in_channels, out_channels)

    out = jax.block_until_ready(residual_block_forward(x, kparams))
    ref = jax.block_until_ready(ref_forward(x, raw))

    assert out.shape == (N, out_channels, H, W), out.shape
    # bf16 MXU inputs -> relaxed tolerance vs. the f32 reference.
    np.testing.assert_allclose(np.asarray(out), np.asarray(ref),
                               rtol=5e-2, atol=5e-2)
    print("KERNEL_OK")
</pallas_src>

<mosaic_0001>
module attributes {stable_mosaic.version = 11 : i64} {
  func.func @resblock_kernel(%arg0: i32, %arg1: memref<1x16x16x8xbf16, #tpu.memory_space<vmem>>, %arg2: memref<3x24x8xbf16, #tpu.memory_space<vmem>>, %arg3: memref<1x8xf32, #tpu.memory_space<vmem>>, %arg4: memref<3x24x8xbf16, #tpu.memory_space<vmem>>, %arg5: memref<1x8xf32, #tpu.memory_space<vmem>>, %arg6: memref<24x8xbf16, #tpu.memory_space<vmem>>, %arg7: memref<1x16x16x8xf32, #tpu.memory_space<vmem>>, %arg8: memref<18x16x24xbf16, #tpu.memory_space<vmem>>, %arg9: memref<18x16x24xbf16, #tpu.memory_space<vmem>>) attributes {dimension_semantics = [#tpu.dimension_semantics<parallel>], iteration_bounds = array<i64: 2>, scalar_prefetch = 0 : i64, scratch_operands = 2 : i64, tpu.core_type = #tpu.core_type<tc>, window_params = [{transform_indices = @transform_0, window_bounds = array<i64: 1, 16, 16, 8>}, {pipeline_mode = #tpu.pipeline_mode<synchronous>, transform_indices = @transform_1, window_bounds = array<i64: 3, 24, 8>}, {pipeline_mode = #tpu.pipeline_mode<synchronous>, transform_indices = @transform_2, window_bounds = array<i64: 1, 8>}, {pipeline_mode = #tpu.pipeline_mode<synchronous>, transform_indices = @transform_3, window_bounds = array<i64: 3, 24, 8>}, {pipeline_mode = #tpu.pipeline_mode<synchronous>, transform_indices = @transform_4, window_bounds = array<i64: 1, 8>}, {pipeline_mode = #tpu.pipeline_mode<synchronous>, transform_indices = @transform_5, window_bounds = array<i64: 24, 8>}, {transform_indices = @transform_6, window_bounds = array<i64: 1, 16, 16, 8>}]} {
    %c0 = arith.constant 0 : index
    %c0_0 = arith.constant 0 : index
    %c0_1 = arith.constant 0 : index
    %c0_2 = arith.constant 0 : index
    %0 = vector.load %arg1[%c0, %c0_0, %c0_1, %c0_2] : memref<1x16x16x8xbf16, #tpu.memory_space<vmem>>, vector<1x16x16x8xbf16>
    %1 = vector.shape_cast %0 : vector<1x16x16x8xbf16> to vector<16x16x8xbf16>
    %cst = arith.constant 0.000000e+00 : bf16
    %2 = vector.broadcast %cst : bf16 to vector<16x1x8xbf16>
    %3 = vector.extract_strided_slice %1 {offsets = [0, 0, 0], sizes = [16, 15, 8], strides = [1, 1, 1]} : vector<16x16x8xbf16> to vector<16x15x8xbf16>
    %4 = tpu.concatenate %2, %3 in 1 : vector<16x1x8xbf16>, vector<16x15x8xbf16> -> vector<16x16x8xbf16>
    %5 = vector.extract_strided_slice %1 {offsets = [0, 1, 0], sizes = [16, 15, 8], strides = [1, 1, 1]} : vector<16x16x8xbf16> to vector<16x15x8xbf16>
    %6 = tpu.concatenate %5, %2 in 1 : vector<16x15x8xbf16>, vector<16x1x8xbf16> -> vector<16x16x8xbf16>
    %7 = tpu.concatenate %4, %1, %6 in 2 : vector<16x16x8xbf16>, vector<16x16x8xbf16>, vector<16x16x8xbf16> -> vector<16x16x24xbf16>
    %cst_3 = arith.constant 0.000000e+00 : bf16
    %8 = vector.broadcast %cst_3 : bf16 to vector<1x16x24xbf16>
    %9 = tpu.concatenate %8, %7, %8 in 0 : vector<1x16x24xbf16>, vector<16x16x24xbf16>, vector<1x16x24xbf16> -> vector<18x16x24xbf16>
    %c0_4 = arith.constant 0 : index
    %c0_5 = arith.constant 0 : index
    %c0_6 = arith.constant 0 : index
    %10 = vector.load %arg8[%c0_4, %c0_5, %c0_6] : memref<18x16x24xbf16, #tpu.memory_space<vmem>>, vector<18x16x24xbf16>
    tpu.vector_store %arg8[%c0_4, %c0_5, %c0_6], %9 {strides = array<i32>} : memref<18x16x24xbf16, #tpu.memory_space<vmem>>, vector<18x16x24xbf16>,
    %cst_7 = arith.constant 0.000000e+00 : f32
    %11 = vector.broadcast %cst_7 : f32 to vector<256x8xf32>
    %c0_8 = arith.constant 0 : index
    %c0_9 = arith.constant 0 : index
    %c0_10 = arith.constant 0 : index
    %12 = vector.load %arg8[%c0_8, %c0_9, %c0_10] : memref<18x16x24xbf16, #tpu.memory_space<vmem>>, vector<16x16x24xbf16>
    %13 = vector.shape_cast %12 : vector<16x16x24xbf16> to vector<256x24xbf16>
    %c0_11 = arith.constant 0 : index
    %c0_12 = arith.constant 0 : index
    %c0_13 = arith.constant 0 : index
    %14 = vector.load %arg2[%c0_11, %c0_12, %c0_13] : memref<3x24x8xbf16, #tpu.memory_space<vmem>>, vector<1x24x8xbf16>
    %15 = vector.shape_cast %14 : vector<1x24x8xbf16> to vector<24x8xbf16>
    %cst_14 = arith.constant dense<0.000000e+00> : vector<256x8xf32>
    %16 = tpu.matmul %13, %15, %cst_14 {dimension_numbers = #tpu.dot_dimension_numbers<[1], [0], [0], [1], [0, 0, 1, 1], [], []>} : vector<256x24xbf16>, vector<24x8xbf16>, vector<256x8xf32> -> vector<256x8xf32>
    %17 = arith.addf %11, %16 : vector<256x8xf32>
    %c1 = arith.constant 1 : index
    %c0_15 = arith.constant 0 : index
    %c0_16 = arith.constant 0 : index
    %18 = vector.load %arg8[%c1, %c0_15, %c0_16] : memref<18x16x24xbf16, #tpu.memory_space<vmem>>, vector<16x16x24xbf16>
    %19 = vector.shape_cast %18 : vector<16x16x24xbf16> to vector<256x24xbf16>
    %c1_17 = arith.constant 1 : index
    %c0_18 = arith.constant 0 : index
    %c0_19 = arith.constant 0 : index
    %20 = vector.load %arg2[%c1_17, %c0_18, %c0_19] : memref<3x24x8xbf16, #tpu.memory_space<vmem>>, vector<1x24x8xbf16>
    %21 = vector.shape_cast %20 : vector<1x24x8xbf16> to vector<24x8xbf16>
    %cst_20 = arith.constant dense<0.000000e+00> : vector<256x8xf32>
    %22 = tpu.matmul %19, %21, %cst_20 {dimension_numbers = #tpu.dot_dimension_numbers<[1], [0], [0], [1], [0, 0, 1, 1], [], []>} : vector<256x24xbf16>, vector<24x8xbf16>, vector<256x8xf32> -> vector<256x8xf32>
    %23 = arith.addf %17, %22 : vector<256x8xf32>
    %c0_21 = arith.constant 0 : index
    %c0_22 = arith.constant 0 : index
    %24 = vector.load %arg6[%c0_21, %c0_22] : memref<24x8xbf16, #tpu.memory_space<vmem>>, vector<24x8xbf16>
    %cst_23 = arith.constant dense<0.000000e+00> : vector<256x8xf32>
    %25 = tpu.matmul %19, %24, %cst_23 {dimension_numbers = #tpu.dot_dimension_numbers<[1], [0], [0], [1], [0, 0, 1, 1], [], []>} : vector<256x24xbf16>, vector<24x8xbf16>, vector<256x8xf32> -> vector<256x8xf32>
    %c2 = arith.constant 2 : index
    %c0_24 = arith.constant 0 : index
    %c0_25 = arith.constant 0 : index
    %26 = vector.load %arg8[%c2, %c0_24, %c0_25] : memref<18x16x24xbf16, #tpu.memory_space<vmem>>, vector<16x16x24xbf16>
    %27 = vector.shape_cast %26 : vector<16x16x24xbf16> to vector<256x24xbf16>
    %c2_26 = arith.constant 2 : index
    %c0_27 = arith.constant 0 : index
    %c0_28 = arith.constant 0 : index
    %28 = vector.load %arg2[%c2_26, %c0_27, %c0_28] : memref<3x24x8xbf16, #tpu.memory_space<vmem>>, vector<1x24x8xbf16>
    %29 = vector.shape_cast %28 : vector<1x24x8xbf16> to vector<24x8xbf16>
    %cst_29 = arith.constant dense<0.000000e+00> : vector<256x8xf32>
    %30 = tpu.matmul %27, %29, %cst_29 {dimension_numbers = #tpu.dot_dimension_numbers<[1], [0], [0], [1], [0, 0, 1, 1], [], []>} : vector<256x24xbf16>, vector<24x8xbf16>, vector<256x8xf32> -> vector<256x8xf32>
    %31 = arith.addf %23, %30 : vector<256x8xf32>
    %c0_30 = arith.constant 0 : index
    %c0_31 = arith.constant 0 : index
    %32 = vector.load %arg3[%c0_30, %c0_31] : memref<1x8xf32, #tpu.memory_space<vmem>>, vector<1x8xf32>
    %33 = vector.broadcast %32 : vector<1x8xf32> to vector<256x8xf32>
    %34 = arith.addf %31, %33 : vector<256x8xf32>
    %cst_32 = arith.constant 0.000000e+00 : f32
    %35 = vector.broadcast %cst_32 : f32 to vector<256x8xf32>
    %36 = arith.maximumf %34, %35 : vector<256x8xf32>
    %37 = arith.truncf %36 : vector<256x8xf32> to vector<256x8xbf16>
    %38 = vector.shape_cast %37 : vector<256x8xbf16> to vector<16x16x8xbf16>
    %cst_33 = arith.constant 0.000000e+00 : bf16
    %39 = vector.broadcast %cst_33 : bf16 to vector<16x1x8xbf16>
    %40 = vector.extract_strided_slice %38 {offsets = [0, 0, 0], sizes = [16, 15, 8], strides = [1, 1, 1]} : vector<16x16x8xbf16> to vector<16x15x8xbf16>
    %41 = tpu.concatenate %39, %40 in 1 : vector<16x1x8xbf16>, vector<16x15x8xbf16> -> vector<16x16x8xbf16>
    %42 = vector.extract_strided_slice %38 {offsets = [0, 1, 0], sizes = [16, 15, 8], strides = [1, 1, 1]} : vector<16x16x8xbf16> to vector<16x15x8xbf16>
    %43 = tpu.concatenate %42, %39 in 1 : vector<16x15x8xbf16>, vector<16x1x8xbf16> -> vector<16x16x8xbf16>
    %44 = tpu.concatenate %41, %38, %43 in 2 : vector<16x16x8xbf16>, vector<16x16x8xbf16>, vector<16x16x8xbf16> -> vector<16x16x24xbf16>
    %cst_34 = arith.constant 0.000000e+00 : bf16
    %45 = vector.broadcast %cst_34 : bf16 to vector<1x16x24xbf16>
    %46 = tpu.concatenate %45, %44, %45 in 0 : vector<1x16x24xbf16>, vector<16x16x24xbf16>, vector<1x16x24xbf16> -> vector<18x16x24xbf16>
    %c0_35 = arith.constant 0 : index
    %c0_36 = arith.constant 0 : index
    %c0_37 = arith.constant 0 : index
    %47 = vector.load %arg9[%c0_35, %c0_36, %c0_37] : memref<18x16x24xbf16, #tpu.memory_space<vmem>>, vector<18x16x24xbf16>
    tpu.vector_store %arg9[%c0_35, %c0_36, %c0_37], %46 {strides = array<i32>} : memref<18x16x24xbf16, #tpu.memory_space<vmem>>, vector<18x16x24xbf16>,
    %cst_38 = arith.constant 0.000000e+00 : f32
    %48 = vector.broadcast %cst_38 : f32 to vector<256x8xf32>
    %c0_39 = arith.constant 0 : index
    %c0_40 = arith.constant 0 : index
    %c0_41 = arith.constant 0 : index
    %49 = vector.load %arg9[%c0_39, %c0_40, %c0_41] : memref<18x16x24xbf16, #tpu.memory_space<vmem>>, vector<16x16x24xbf16>
    %50 = vector.shape_cast %49 : vector<16x16x24xbf16> to vector<256x24xbf16>
    %c0_42 = arith.constant 0 : index
    %c0_43 = arith.constant 0 : index
    %c0_44 = arith.constant 0 : index
    %51 = vector.load %arg4[%c0_42, %c0_43, %c0_44] : memref<3x24x8xbf16, #tpu.memory_space<vmem>>, vector<1x24x8xbf16>
    %52 = vector.shape_cast %51 : vector<1x24x8xbf16> to vector<24x8xbf16>
    %cst_45 = arith.constant dense<0.000000e+00> : vector<256x8xf32>
    %53 = tpu.matmul %50, %52, %cst_45 {dimension_numbers = #tpu.dot_dimension_numbers<[1], [0], [0], [1], [0, 0, 1, 1], [], []>} : vector<256x24xbf16>, vector<24x8xbf16>, vector<256x8xf32> -> vector<256x8xf32>
    %54 = arith.addf %48, %53 : vector<256x8xf32>
    %c1_46 = arith.constant 1 : index
    %c0_47 = arith.constant 0 : index
    %c0_48 = arith.constant 0 : index
    %55 = vector.load %arg9[%c1_46, %c0_47, %c0_48] : memref<18x16x24xbf16, #tpu.memory_space<vmem>>, vector<16x16x24xbf16>
    %56 = vector.shape_cast %55 : vector<16x16x24xbf16> to vector<256x24xbf16>
    %c1_49 = arith.constant 1 : index
    %c0_50 = arith.constant 0 : index
    %c0_51 = arith.constant 0 : index
    %57 = vector.load %arg4[%c1_49, %c0_50, %c0_51] : memref<3x24x8xbf16, #tpu.memory_space<vmem>>, vector<1x24x8xbf16>
    %58 = vector.shape_cast %57 : vector<1x24x8xbf16> to vector<24x8xbf16>
    %cst_52 = arith.constant dense<0.000000e+00> : vector<256x8xf32>
    %59 = tpu.matmul %56, %58, %cst_52 {dimension_numbers = #tpu.dot_dimension_numbers<[1], [0], [0], [1], [0, 0, 1, 1], [], []>} : vector<256x24xbf16>, vector<24x8xbf16>, vector<256x8xf32> -> vector<256x8xf32>
    %60 = arith.addf %54, %59 : vector<256x8xf32>
    %c2_53 = arith.constant 2 : index
    %c0_54 = arith.constant 0 : index
    %c0_55 = arith.constant 0 : index
    %61 = vector.load %arg9[%c2_53, %c0_54, %c0_55] : memref<18x16x24xbf16, #tpu.memory_space<vmem>>, vector<16x16x24xbf16>
    %62 = vector.shape_cast %61 : vector<16x16x24xbf16> to vector<256x24xbf16>
    %c2_56 = arith.constant 2 : index
    %c0_57 = arith.constant 0 : index
    %c0_58 = arith.constant 0 : index
    %63 = vector.load %arg4[%c2_56, %c0_57, %c0_58] : memref<3x24x8xbf16, #tpu.memory_space<vmem>>, vector<1x24x8xbf16>
    %64 = vector.shape_cast %63 : vector<1x24x8xbf16> to vector<24x8xbf16>
    %cst_59 = arith.constant dense<0.000000e+00> : vector<256x8xf32>
    %65 = tpu.matmul %62, %64, %cst_59 {dimension_numbers = #tpu.dot_dimension_numbers<[1], [0], [0], [1], [0, 0, 1, 1], [], []>} : vector<256x24xbf16>, vector<24x8xbf16>, vector<256x8xf32> -> vector<256x8xf32>
    %66 = arith.addf %60, %65 : vector<256x8xf32>
    %c0_60 = arith.constant 0 : index
    %c0_61 = arith.constant 0 : index
    %67 = vector.load %arg5[%c0_60, %c0_61] : memref<1x8xf32, #tpu.memory_space<vmem>>, vector<1x8xf32>
    %68 = vector.broadcast %67 : vector<1x8xf32> to vector<256x8xf32>
    %69 = arith.addf %66, %68 : vector<256x8xf32>
    %70 = arith.addf %69, %25 : vector<256x8xf32>
    %cst_62 = arith.constant 0.000000e+00 : f32
    %71 = vector.broadcast %cst_62 : f32 to vector<256x8xf32>
    %72 = arith.maximumf %70, %71 : vector<256x8xf32>
    %73 = vector.shape_cast %72 : vector<256x8xf32> to vector<16x16x8xf32>
    %c0_63 = arith.constant 0 : index
    %c0_64 = arith.constant 0 : index
    %c0_65 = arith.constant 0 : index
    %c0_66 = arith.constant 0 : index
    %74 = vector.load %arg7[%c0_63, %c0_64, %c0_65, %c0_66] : memref<1x16x16x8xf32, #tpu.memory_space<vmem>>, vector<1x16x16x8xf32>
    %75 = vector.shape_cast %74 : vector<1x16x16x8xf32> to vector<16x16x8xf32>
    %76 = vector.shape_cast %73 : vector<16x16x8xf32> to vector<1x16x16x8xf32>
    tpu.vector_store %arg7[%c0_63, %c0_64, %c0_65, %c0_66], %76 {strides = array<i32>} : memref<1x16x16x8xf32, #tpu.memory_space<vmem>>, vector<1x16x16x8xf32>,
    return
  }
  func.func @transform_0(%arg0: i32) -> (i32, i32, i32, i32) {
    %c0_i32 = arith.constant 0 : i32
    %c0_i32_0 = arith.constant 0 : i32
    %c0_i32_1 = arith.constant 0 : i32
    %c0_i32_2 = arith.constant 0 : i32
    return %arg0, %c0_i32, %c0_i32_0, %c0_i32_1 : i32, i32, i32, i32
  }
  func.func @transform_1(%arg0: i32) -> (i32, i32, i32) {
    %c0_i32 = arith.constant 0 : i32
    %c0_i32_0 = arith.constant 0 : i32
    %c0_i32_1 = arith.constant 0 : i32
    %c0_i32_2 = arith.constant 0 : i32
    return %c0_i32, %c0_i32_0, %c0_i32_1 : i32, i32, i32
  }
  func.func @transform_2(%arg0: i32) -> (i32, i32) {
    %c0_i32 = arith.constant 0 : i32
    %c0_i32_0 = arith.constant 0 : i32
    %c0_i32_1 = arith.constant 0 : i32
    return %c0_i32, %c0_i32_0 : i32, i32
  }
  func.func @transform_3(%arg0: i32) -> (i32, i32, i32) {
    %c0_i32 = arith.constant 0 : i32
    %c0_i32_0 = arith.constant 0 : i32
    %c0_i32_1 = arith.constant 0 : i32
    %c0_i32_2 = arith.constant 0 : i32
    return %c0_i32, %c0_i32_0, %c0_i32_1 : i32, i32, i32
  }
  func.func @transform_4(%arg0: i32) -> (i32, i32) {
    %c0_i32 = arith.constant 0 : i32
    %c0_i32_0 = arith.constant 0 : i32
    %c0_i32_1 = arith.constant 0 : i32
    return %c0_i32, %c0_i32_0 : i32, i32
  }
  func.func @transform_5(%arg0: i32) -> (i32, i32) {
    %c0_i32 = arith.constant 0 : i32
    %c0_i32_0 = arith.constant 0 : i32
    %c0_i32_1 = arith.constant 0 : i32
    return %c0_i32, %c0_i32_0 : i32, i32
  }
  func.func @transform_6(%arg0: i32) -> (i32, i32, i32, i32) {
    %c0_i32 = arith.constant 0 : i32
    %c0_i32_0 = arith.constant 0 : i32
    %c0_i32_1 = arith.constant 0 : i32
    %c0_i32_2 = arith.constant 0 : i32
    return %arg0, %c0_i32, %c0_i32_0, %c0_i32_1 : i32, i32, i32, i32
  }
}

</mosaic_0001>

<llo_original>
// kernel: residual_block_forward.1
$region0: #{residual_block_forward.1}
  #allocation0 [shape = 'u32[]', space=smem, size = 0x4, offset = 0x4, fixed_abs, tag = 'smem constant byte address 0x4 - core index']
  #allocation1 [shape = 'u32[144,128]{1,0:T(1,128)}', space=vmem, size = 0x12000, scoped, tag = 'internal scratch']
  #allocation2 [shape = 'bf16[18,16,24]{2,1,0:T(16,128)(2,1)}', space=vmem, size = 0x12000, scoped, tag = 'scratch operand']
  #allocation3 [shape = 'bf16[18,16,24]{2,1,0:T(16,128)(2,1)}', space=vmem, size = 0x12000, scoped, tag = 'scratch operand']
  %s0 = inlined_call_operand.vmem [shape: bf16[2,16,16,8], index: 0, kind: input, shape index: {}]
  %s1 = inlined_call_operand.vmem [shape: bf16[3,24,8], index: 1, kind: input, shape index: {}]
  %s2 = inlined_call_operand.vmem [shape: f32[1,8], index: 2, kind: input, shape index: {}]
  %s3 = inlined_call_operand.vmem [shape: bf16[3,24,8], index: 3, kind: input, shape index: {}]
  %s4 = inlined_call_operand.vmem [shape: f32[1,8], index: 4, kind: input, shape index: {}]
  %s5 = inlined_call_operand.vmem [shape: bf16[24,8], index: 5, kind: input, shape index: {}]
  %s6 = inlined_call_operand.vmem [shape: f32[2,16,16,8], index: 6, kind: output, shape index: {}]
  %s7 = sld [smem:[#allocation0]]
  $region57: #{residual_block_forward.1} parent=0
    _
  %s9 = ssub.s32 1, %s7
  %s10 = scalar_select 0, %s9, %s7
  loop: start=0, step=1, limit=4
  $region2: #{residual_block_forward.1} parent=0 // loop_pre_header
    _
  $region3: #{residual_block_forward.1} parent=0 // loop_header
    %s12 = sphi 0, %s16
    %p13 = scmp.ge.s32.totalorder %s12, 4
    %s22 = sphi 0, %s24
    %s25 = sphi 0, %s22
    %s26 = sphi 0, %s25
    %s42 = sphi 0, %s26
    %s46 = sphi 0, %s46
    %s48 = sphi 0, %s46
    %s49 = sphi 0, %s48
    %s63 = sphi 0, %s49
    %s67 = sphi 0, %s67
    %s69 = sphi 0, %s67
    %s70 = sphi 0, %s69
    %s84 = sphi 0, %s70
    %s88 = sphi 0, %s88
    %s90 = sphi 0, %s88
    %s91 = sphi 0, %s90
    %s105 = sphi 0, %s91
    %s109 = sphi 0, %s109
    %s111 = sphi 0, %s109
    %s112 = sphi 0, %s111
    %s126 = sphi 0, %s112
    %s130 = sphi 0, %s130
    %s132 = sphi 0, %s130
    %s133 = sphi 0, %s132
    %s147 = sphi 0, %s133
    %s153 = sphi 0, %s155
    %s156 = sphi 0, %s153
    %s157 = sphi 0, %s156
    %s173 = sphi 0, %s157
  $region4: #{residual_block_forward.1} parent=0 // loop_header_branch
    %15 = sbr.rel (%p13) target = $region8
  $region5: #{residual_block_forward.1} parent=0 // loop_body
    %s17 = ssub.s32 %s12, 1
    %s18 = ssub.s32 %s12, 2
    %s19 = sadd.s32 %s12, 1
    %s20 = ssub.s32 %s12, %s19
    %p21 = scmp.eq.s32.totalorder %s20, 0
    %s23 = sadd.s32 %s22, 1
    %s24 = scalar_select %p21, %s22, %s23
    %p27 = pneg %p21
    %p28 = scmp.eq.s32.totalorder %s12, 1
    %p29 = por %p27, %p28
    %p30 = scmp.ne.s32.totalorder %s22, %s25
    %p31 = scmp.eq.s32.totalorder %s12, 0
    %p32 = por %p30, %p31
    %p33 = scmp.ne.s32.totalorder %s22, %s25
    %p34 = scmp.eq.s32.totalorder %s17, 1
    %p35 = por %p33, %p34
    %p36 = scmp.ne.s32.totalorder %s25, %s26
    %p37 = scmp.eq.s32.totalorder %s17, 0
    %p38 = por %p36, %p37
    %p39 = scmp.ne.s32.totalorder %s25, %s26
    %p40 = scmp.eq.s32.totalorder %s18, 1
    %p41 = por %p39, %p40
    %p43 = scmp.ne.s32.totalorder %s26, %s42
    %p44 = scmp.eq.s32.totalorder %s18, 0
    %p45 = por %p43, %p44
    %s47 = sadd.s32 %s46, 1
    %p50 = scmp.eq.s32.totalorder %s12, 1
    %p51 = scmp.ne.s32.totalorder %s46, %s48
    %p52 = scmp.eq.s32.totalorder %s12, 0
    %p53 = por %p51, %p52
    %p54 = scmp.ne.s32.totalorder %s46, %s48
    %p55 = scmp.eq.s32.totalorder %s17, 1
    %p56 = por %p54, %p55
    %p57 = scmp.ne.s32.totalorder %s48, %s49
    %p58 = scmp.eq.s32.totalorder %s17, 0
    %p59 = por %p57, %p58
    %p60 = scmp.ne.s32.totalorder %s48, %s49
    %p61 = scmp.eq.s32.totalorder %s18, 1
    %p62 = por %p60, %p61
    %p64 = scmp.ne.s32.totalorder %s49, %s63
    %p65 = scmp.eq.s32.totalorder %s18, 0
    %p66 = por %p64, %p65
    %s68 = sadd.s32 %s67, 1
    %p71 = scmp.eq.s32.totalorder %s12, 1
    %p72 = scmp.ne.s32.totalorder %s67, %s69
    %p73 = scmp.eq.s32.totalorder %s12, 0
    %p74 = por %p72, %p73
    %p75 = scmp.ne.s32.totalorder %s67, %s69
    %p76 = scmp.eq.s32.totalorder %s17, 1
    %p77 = por %p75, %p76
    %p78 = scmp.ne.s32.totalorder %s69, %s70
    %p79 = scmp.eq.s32.totalorder %s17, 0
    %p80 = por %p78, %p79
    %p81 = scmp.ne.s32.totalorder %s69, %s70
    %p82 = scmp.eq.s32.totalorder %s18, 1
    %p83 = por %p81, %p82
    %p85 = scmp.ne.s32.totalorder %s70, %s84
    %p86 = scmp.eq.s32.totalorder %s18, 0
    %p87 = por %p85, %p86
    %s89 = sadd.s32 %s88, 1
    %p92 = scmp.eq.s32.totalorder %s12, 1
    %p93 = scmp.ne.s32.totalorder %s88, %s90
    %p94 = scmp.eq.s32.totalorder %s12, 0
    %p95 = por %p93, %p94
    %p96 = scmp.ne.s32.totalorder %s88, %s90
    %p97 = scmp.eq.s32.totalorder %s17, 1
    %p98 = por %p96, %p97
    %p99 = scmp.ne.s32.totalorder %s90, %s91
    %p100 = scmp.eq.s32.totalorder %s17, 0
    %p101 = por %p99, %p100
    %p102 = scmp.ne.s32.totalorder %s90, %s91
    %p103 = scmp.eq.s32.totalorder %s18, 1
    %p104 = por %p102, %p103
    %p106 = scmp.ne.s32.totalorder %s91, %s105
    %p107 = scmp.eq.s32.totalorder %s18, 0
    %p108 = por %p106, %p107
    %s110 = sadd.s32 %s109, 1
    %p113 = scmp.eq.s32.totalorder %s12, 1
    %p114 = scmp.ne.s32.totalorder %s109, %s111
    %p115 = scmp.eq.s32.totalorder %s12, 0
    %p116 = por %p114, %p115
    %p117 = scmp.ne.s32.totalorder %s109, %s111
    %p118 = scmp.eq.s32.totalorder %s17, 1
    %p119 = por %p117, %p118
    %p120 = scmp.ne.s32.totalorder %s111, %s112
    %p121 = scmp.eq.s32.totalorder %s17, 0
    %p122 = por %p120, %p121
    %p123 = scmp.ne.s32.totalorder %s111, %s112
    %p124 = scmp.eq.s32.totalorder %s18, 1
    %p125 = por %p123, %p124
    %p127 = scmp.ne.s32.totalorder %s112, %s126
    %p128 = scmp.eq.s32.totalorder %s18, 0
    %p129 = por %p127, %p128
    %s131 = sadd.s32 %s130, 1
    %p134 = scmp.eq.s32.totalorder %s12, 1
    %p135 = scmp.ne.s32.totalorder %s130, %s132
    %p136 = scmp.eq.s32.totalorder %s12, 0
    %p137 = por %p135, %p136
    %p138 = scmp.ne.s32.totalorder %s130, %s132
    %p139 = scmp.eq.s32.totalorder %s17, 1
    %p140 = por %p138, %p139
    %p141 = scmp.ne.s32.totalorder %s132, %s133
    %p142 = scmp.eq.s32.totalorder %s17, 0
    %p143 = por %p141, %p142
    %p144 = scmp.ne.s32.totalorder %s132, %s133
    %p145 = scmp.eq.s32.totalorder %s18, 1
    %p146 = por %p144, %p145
    %p148 = scmp.ne.s32.totalorder %s133, %s147
    %p149 = scmp.eq.s32.totalorder %s18, 0
    %p150 = por %p148, %p149
    %s151 = ssub.s32 %s12, %s19
    %p152 = scmp.eq.s32.totalorder %s151, 0
    %s154 = sadd.s32 %s153, 1
    %s155 = scalar_select %p152, %s153, %s154
    %p158 = pneg %p152
    %p159 = scmp.eq.s32.totalorder %s12, 1
    %p160 = por %p158, %p159
    %p161 = scmp.ne.s32.totalorder %s153, %s156
    %p162 = scmp.eq.s32.totalorder %s12, 0
    %p163 = por %p161, %p162
    %p164 = scmp.ne.s32.totalorder %s153, %s156
    %p165 = scmp.eq.s32.totalorder %s17, 1
    %p166 = por %p164, %p165
    %p167 = scmp.ne.s32.totalorder %s156, %s157
    %p168 = scmp.eq.s32.totalorder %s17, 0
    %p169 = por %p167, %p168
    %p170 = scmp.ne.s32.totalorder %s156, %s157
    %p171 = scmp.eq.s32.totalorder %s18, 1
    %p172 = por %p170, %p171
    %p174 = scmp.ne.s32.totalorder %s157, %s173
    %p175 = scmp.eq.s32.totalorder %s18, 0
    %p176 = por %p174, %p175
    %p177 = scmp.le.s32.totalorder 1, %s12
    %p178 = scmp.lt.s32.totalorder %s12, 3
    %p179 = pnand %p177, %p178
    %p180 = pneg %p179
    // Predicated region
    $region9: #{residual_block_forward.1} parent=5 // pred_check
      _
    $region10: #{residual_block_forward.1} parent=5 // pred_check_branch
      %182 = sbr.rel (%p179) target = $region12
    $region11: #{residual_block_forward.1} parent=5 // pred_region
      %s183 = ssub.s32 %s12, 1
      // Predicated region
      $region13: #{residual_block_forward.1} parent=11 // pred_check
        %p184 = pneg %p59
      $region14: #{residual_block_forward.1} parent=11 // pred_check_branch
        %186 = sbr.rel (%p184) target = $region16
      $region15: #{residual_block_forward.1} parent=11 // pred_region
        _
      $region16: #{residual_block_forward.1} parent=11 // pred_fallthru
        _
      // Predicated region
      $region17: #{residual_block_forward.1} parent=11 // pred_check
        %p187 = pneg %p80
      $region18: #{residual_block_forward.1} parent=11 // pred_check_branch
        %189 = sbr.rel (%p187) target = $region20
      $region19: #{residual_block_forward.1} parent=11 // pred_region
        _
      $region20: #{residual_block_forward.1} parent=11 // pred_fallthru
        _
      // Predicated region
      $region21: #{residual_block_forward.1} parent=11 // pred_check
        %p190 = pneg %p101
      $region22: #{residual_block_forward.1} parent=11 // pred_check_branch
        %192 = sbr.rel (%p190) target = $region24
      $region23: #{residual_block_forward.1} parent=11 // pred_region
        _
      $region24: #{residual_block_forward.1} parent=11 // pred_fallthru
        _
      // Predicated region
      $region25: #{residual_block_forward.1} parent=11 // pred_check
        %p193 = pneg %p122
      $region26: #{residual_block_forward.1} parent=11 // pred_check_branch
        %195 = sbr.rel (%p193) target = $region28
      $region27: #{residual_block_forward.1} parent=11 // pred_region
        _
      $region28: #{residual_block_forward.1} parent=11 // pred_fallthru
        _
      // Predicated region
      $region29: #{residual_block_forward.1} parent=11 // pred_check
        %p196 = pneg %p143
      $region30: #{residual_block_forward.1} parent=11 // pred_check_branch
        %198 = sbr.rel (%p196) target = $region32
      $region31: #{residual_block_forward.1} parent=11 // pred_region
        _
      $region32: #{residual_block_forward.1} parent=11 // pred_fallthru
        _
    $region12: #{residual_block_forward.1} parent=5 // pred_fallthru
      _
    %p199 = scmp.lt.s32.totalorder %s12, 2
    // Predicated region
    $region33: #{residual_block_forward.1} parent=5 // pred_check
      %p200 = pneg %p199
    $region34: #{residual_block_forward.1} parent=5 // pred_check_branch
      %202 = sbr.rel (%p200) target = $region36
    $region35: #{residual_block_forward.1} parent=5 // pred_region
      // Predicated region
      $region37: #{residual_block_forward.1} parent=35 // pred_check
        %p203 = pneg %p32
      $region38: #{residual_block_forward.1} parent=35 // pred_check_branch
        %205 = sbr.rel (%p203) target = $region40
      $region39: #{residual_block_forward.1} parent=35 // pred_region
        %p206 = scmp.lt.s32.totalorder %s12, 1
        %s207 = scalar_select %p206, %s12, 1
        %s208 = smul.addr %s207, 32
        %s209 = smul.addr %s208, 4
        %s210 = scalar_lea.vmem %s0, %s209
      $region40: #{residual_block_forward.1} parent=35 // pred_fallthru
        _
    $region36: #{residual_block_forward.1} parent=5 // pred_fallthru
      _
    %p211 = scmp.le.s32.totalorder 1, %s12
    %p212 = scmp.lt.s32.totalorder %s12, 3
    %p213 = pnand %p211, %p212
    %p214 = pneg %p213
    // Predicated region
    $region41: #{residual_block_forward.1} parent=5 // pred_check
      _
    $region42: #{residual_block_forward.1} parent=5 // pred_check_branch
      %216 = sbr.rel (%p213) target = $region44
    $region43: #{residual_block_forward.1} parent=5 // pred_region
      %s217 = ssub.s32 %s12, 1
      %p218 = scmp.lt.s32.totalorder %s17, 1
      %s219 = scalar_select %p218, %s17, 1
      %s220 = smul.addr %s219, 32
      %s221 = smul.addr %s220, 4
      %s222 = scalar_lea.vmem %s0, %s221
      %p223 = pneg %p38
      %p224 = pneg %p35
      %p225 = pneg %p59
      %p226 = pneg %p56
      %p227 = pneg %p80
      %p228 = pneg %p77
      %p229 = pneg %p101
      %p230 = pneg %p98
      %p231 = pneg %p122
      %p232 = pneg %p119
      %p233 = pneg %p143
      %p234 = pneg %p140
      %p235 = pneg %p169
      %p236 = pneg %p166
      %p237 = scmp.lt.s32.totalorder %s17, 1
      %s238 = scalar_select %p237, %s17, 1
      %s239 = smul.addr %s238, 32
      %s240 = smul.addr %s239, 8
      %s241 = scalar_lea.vmem %s6, %s240
      %p242 = scmp.lt.s32.totalorder %s17, 1
      %s243 = scalar_select %p242, %s17, 1
      %s244 = smul.addr %s243, 32
      %s245 = smul.addr %s244, 4
      %s246 = scalar_lea.vmem %s0, %s245
      %p247 = scmp.lt.s32.totalorder %s17, 1
      %s248 = scalar_select %p247, %s17, 1
      %s249 = smul.addr %s248, 32
      %s250 = smul.addr %s249, 8
      %s251 = scalar_lea.vmem %s6, %s250
      %v253 = vld [vmem:[%s246] sm:$0xf]
      %v254 = vld [vmem:[%s246 + $0x4] sm:$0xf]
      %v255 = vld [vmem:[%s246 + $0x8] sm:$0xf]
      %v256 = vld [vmem:[%s246 + $0xc] sm:$0xf]
      %v257 = vld [vmem:[%s246 + $0x10] sm:$0xf]
      %v258 = vld [vmem:[%s246 + $0x14] sm:$0xf]
      %v259 = vld [vmem:[%s246 + $0x18] sm:$0xf]
      %v260 = vld [vmem:[%s246 + $0x1c] sm:$0xf]
      %v261 = vld [vmem:[%s246 + $0x20] sm:$0xf]
      %v262 = vld [vmem:[%s246 + $0x24] sm:$0xf]
      %v263 = vld [vmem:[%s246 + $0x28] sm:$0xf]
      %v264 = vld [vmem:[%s246 + $0x2c] sm:$0xf]
      %v265 = vld [vmem:[%s246 + $0x30] sm:$0xf]
      %v266 = vld [vmem:[%s246 + $0x34] sm:$0xf]
      %v267 = vld [vmem:[%s246 + $0x38] sm:$0xf]
      %v268 = vld [vmem:[%s246 + $0x3c] sm:$0xf]
      %v269 = vld [vmem:[%s246 + $0x40] sm:$0xf]
      %v270 = vld [vmem:[%s246 + $0x44] sm:$0xf]
      %v271 = vld [vmem:[%s246 + $0x48] sm:$0xf]
      %v272 = vld [vmem:[%s246 + $0x4c] sm:$0xf]
      %v273 = vld [vmem:[%s246 + $0x50] sm:$0xf]
      %v274 = vld [vmem:[%s246 + $0x54] sm:$0xf]
      %v275 = vld [vmem:[%s246 + $0x58] sm:$0xf]
      %v276 = vld [vmem:[%s246 + $0x5c] sm:$0xf]
      %v277 = vld [vmem:[%s246 + $0x60] sm:$0xf]
      %v278 = vld [vmem:[%s246 + $0x64] sm:$0xf]
      %v279 = vld [vmem:[%s246 + $0x68] sm:$0xf]
      %v280 = vld [vmem:[%s246 + $0x6c] sm:$0xf]
      %v281 = vld [vmem:[%s246 + $0x70] sm:$0xf]
      %v282 = vld [vmem:[%s246 + $0x74] sm:$0xf]
      %v283 = vld [vmem:[%s246 + $0x78] sm:$0xf]
      %v284 = vld [vmem:[%s246 + $0x7c] sm:$0xf]
      %v317 = vunpack.c.l.b16 %v253
      %v318 = vunpack.c.l.b16 %v254
      %v319 = vunpack.c.l.b16 %v255
      %v320 = vunpack.c.l.b16 %v256
      %v321 = vunpack.c.l.b16 %v257
      %v322 = vunpack.c.l.b16 %v258
      %v323 = vunpack.c.l.b16 %v259
      %v324 = vunpack.c.l.b16 %v260
      %v325 = vunpack.c.l.b16 %v261
      %v326 = vunpack.c.l.b16 %v262
      %v327 = vunpack.c.l.b16 %v263
      %v328 = vunpack.c.l.b16 %v264
      %v329 = vunpack.c.l.b16 %v265
      %v330 = vunpack.c.l.b16 %v266
      %v331 = vunpack.c.l.b16 %v267
      %v332 = vunpack.c.l.b16 %v268
      %v333 = vunpack.c.l.b16 %v269
      %v334 = vunpack.c.l.b16 %v270
      %v335 = vunpack.c.l.b16 %v271
      %v336 = vunpack.c.l.b16 %v272
      %v337 = vunpack.c.l.b16 %v273
      %v338 = vunpack.c.l.b16 %v274
      %v339 = vunpack.c.l.b16 %v275
      %v340 = vunpack.c.l.b16 %v276
      %v341 = vunpack.c.l.b16 %v277
      %v342 = vunpack.c.l.b16 %v278
      %v343 = vunpack.c.l.b16 %v279
      %v344 = vunpack.c.l.b16 %v280
      %v345 = vunpack.c.l.b16 %v281
      %v346 = vunpack.c.l.b16 %v282
      %v347 = vunpack.c.l.b16 %v283
      %v348 = vunpack.c.l.b16 %v284
      %v349 = vpack.c.b16 %v318, %v317
      %v350 = vpack.c.b16 %v320, %v319
      %v351 = vpack.c.b16 %v322, %v321
      %v352 = vpack.c.b16 %v324, %v323
      %v353 = vpack.c.b16 %v326, %v325
      %v354 = vpack.c.b16 %v328, %v327
      %v355 = vpack.c.b16 %v330, %v329
      %v356 = vpack.c.b16 %v332, %v331
      %v357 = vpack.c.b16 %v334, %v333
      %v358 = vpack.c.b16 %v336, %v335
      %v359 = vpack.c.b16 %v338, %v337
      %v360 = vpack.c.b16 %v340, %v339
      %v361 = vpack.c.b16 %v342, %v341
      %v362 = vpack.c.b16 %v344, %v343
      %v363 = vpack.c.b16 %v346, %v345
      %v364 = vpack.c.b16 %v348, %v347
      %v366 = vshrl.u32 %v349, 16
      %v368 = vrot.slane %v366, 7
      %v369 = vshll.u32 %v349, 16
      %v371 = vor.u32 %v368, %v369
      %v373 = vshrl.u32 %v350, 16
      %v375 = vrot.slane %v373, 7
      %v376 = vshll.u32 %v350, 16
      %v378 = vor.u32 %v375, %v376
      %v380 = vshrl.u32 %v351, 16
      %v382 = vrot.slane %v380, 7
      %v383 = vshll.u32 %v351, 16
      %v385 = vor.u32 %v382, %v383
      %v387 = vshrl.u32 %v352, 16
      %v389 = vrot.slane %v387, 7
      %v390 = vshll.u32 %v352, 16
      %v392 = vor.u32 %v389, %v390
      %v394 = vshrl.u32 %v353, 16
      %v396 = vrot.slane %v394, 7
      %v397 = vshll.u32 %v353, 16
      %v399 = vor.u32 %v396, %v397
      %v401 = vshrl.u32 %v354, 16
      %v403 = vrot.slane %v401, 7
      %v404 = vshll.u32 %v354, 16
      %v406 = vor.u32 %v403, %v404
      %v408 = vshrl.u32 %v355, 16
      %v410 = vrot.slane %v408, 7
      %v411 = vshll.u32 %v355, 16
      %v413 = vor.u32 %v410, %v411
      %v415 = vshrl.u32 %v356, 16
      %v417 = vrot.slane %v415, 7
      %v418 = vshll.u32 %v356, 16
      %v420 = vor.u32 %v417, %v418
      %v422 = vshrl.u32 %v357, 16
      %v424 = vrot.slane %v422, 7
      %v425 = vshll.u32 %v357, 16
      %v427 = vor.u32 %v424, %v425
      %v429 = vshrl.u32 %v358, 16
      %v431 = vrot.slane %v429, 7
      %v432 = vshll.u32 %v358, 16
      %v434 = vor.u32 %v431, %v432
      %v436 = vshrl.u32 %v359, 16
      %v438 = vrot.slane %v436, 7
      %v439 = vshll.u32 %v359, 16
      %v441 = vor.u32 %v438, %v439
      %v443 = vshrl.u32 %v360, 16
      %v445 = vrot.slane %v443, 7
      %v446 = vshll.u32 %v360, 16
      %v448 = vor.u32 %v445, %v446
      %v450 = vshrl.u32 %v361, 16
      %v452 = vrot.slane %v450, 7
      %v453 = vshll.u32 %v361, 16
      %v455 = vor.u32 %v452, %v453
      %v457 = vshrl.u32 %v362, 16
      %v459 = vrot.slane %v457, 7
      %v460 = vshll.u32 %v362, 16
      %v462 = vor.u32 %v459, %v460
      %v464 = vshrl.u32 %v363, 16
      %v466 = vrot.slane %v464, 7
      %v467 = vshll.u32 %v363, 16
      %v469 = vor.u32 %v466, %v467
      %v471 = vshrl.u32 %v364, 16
      %v473 = vrot.slane %v471, 7
      %v474 = vshll.u32 %v364, 16
      %v476 = vor.u32 %v473, %v474
      %vm493 = vcmask 1040384
      %vm494 = vsmask.f32 256
      %vm495 = vmand %vm493, %vm494
      %v496 = vsel %vm495, 0, %v371
      %v497 = vsel %vm495, 0, %v378
      %v498 = vsel %vm495, 0, %v385
      %v499 = vsel %vm495, 0, %v392
      %v500 = vsel %vm495, 0, %v399
      %v501 = vsel %vm495, 0, %v406
      %v502 = vsel %vm495, 0, %v413
      %v503 = vsel %vm495, 0, %v420
      %v504 = vsel %vm495, 0, %v427
      %v505 = vsel %vm495, 0, %v434
      %v506 = vsel %vm495, 0, %v441
      %v507 = vsel %vm495, 0, %v448
      %v508 = vsel %vm495, 0, %v455
      %v509 = vsel %vm495, 0, %v462
      %v510 = vsel %vm495, 0, %v469
      %v511 = vsel %vm495, 0, %v476
      %v512 = vrot.slane %v369, 1
      %v513 = vor.u32 %v366, %v512
      %v514 = vrot.slane %v376, 1
      %v515 = vor.u32 %v373, %v514
      %v516 = vrot.slane %v383, 1
      %v517 = vor.u32 %v380, %v516
      %v518 = vrot.slane %v390, 1
      %v519 = vor.u32 %v387, %v518
      %v520 = vrot.slane %v397, 1
      %v521 = vor.u32 %v394, %v520
      %v522 = vrot.slane %v404, 1
      %v523 = vor.u32 %v401, %v522
      %v524 = vrot.slane %v411, 1
      %v525 = vor.u32 %v408, %v524
      %v526 = vrot.slane %v418, 1
      %v527 = vor.u32 %v415, %v526
      %v528 = vrot.slane %v425, 1
      %v529 = vor.u32 %v422, %v528
      %v530 = vrot.slane %v432, 1
      %v531 = vor.u32 %v429, %v530
      %v532 = vrot.slane %v439, 1
      %v533 = vor.u32 %v436, %v532
      %v534 = vrot.slane %v446, 1
      %v535 = vor.u32 %v443, %v534
      %v536 = vrot.slane %v453, 1
      %v537 = vor.u32 %v450, %v536
      %v538 = vrot.slane %v460, 1
      %v539 = vor.u32 %v457, %v538
      %v540 = vrot.slane %v467, 1
      %v541 = vor.u32 %v464, %v540
      %v542 = vrot.slane %v474, 1
      %v543 = vor.u32 %v471, %v542
      %vm560 = vcmask 1047552
      %vm561 = vsmask.f32 7424
      %vm562 = vmand %vm560, %vm561
      %v563 = vsel %vm562, %v513, 0
      %v564 = vsel %vm562, %v515, 0
      %v565 = vsel %vm562, %v517, 0
      %v566 = vsel %vm562, %v519, 0
      %v567 = vsel %vm562, %v521, 0
      %v568 = vsel %vm562, %v523, 0
      %v569 = vsel %vm562, %v525, 0
      %v570 = vsel %vm562, %v527, 0
      %v571 = vsel %vm562, %v529, 0
      %v572 = vsel %vm562, %v531, 0
      %v573 = vsel %vm562, %v533, 0
      %v574 = vsel %vm562, %v535, 0
      %v575 = vsel %vm562, %v537, 0
      %v576 = vsel %vm562, %v539, 0
      %v577 = vsel %vm562, %v541, 0
      %v578 = vsel %vm562, %v543, 0
      %579 = vrot.lane.b32.xlu0 %v349, 8
      %v580 = vpop.permute.xlu0 %579
      %581 = vrot.lane.b32.xlu0 %v350, 8
      %v582 = vpop.permute.xlu0 %581
      %583 = vrot.lane.b32.xlu0 %v351, 8
      %v584 = vpop.permute.xlu0 %583
      %585 = vrot.lane.b32.xlu0 %v352, 8
      %v586 = vpop.permute.xlu0 %585
      %587 = vrot.lane.b32.xlu0 %v353, 8
      %v588 = vpop.permute.xlu0 %587
      %589 = vrot.lane.b32.xlu0 %v354, 8
      %v590 = vpop.permute.xlu0 %589
      %591 = vrot.lane.b32.xlu0 %v355, 8
      %v592 = vpop.permute.xlu0 %591
      %593 = vrot.lane.b32.xlu0 %v356, 8
      %v594 = vpop.permute.xlu0 %593
      %595 = vrot.lane.b32.xlu0 %v357, 8
      %v596 = vpop.permute.xlu0 %595
      %597 = vrot.lane.b32.xlu0 %v358, 8
      %v598 = vpop.permute.xlu0 %597
      %599 = vrot.lane.b32.xlu0 %v359, 8
      %v600 = vpop.permute.xlu0 %599
      %601 = vrot.lane.b32.xlu0 %v360, 8
      %v602 = vpop.permute.xlu0 %601
      %603 = vrot.lane.b32.xlu0 %v361, 8
      %v604 = vpop.permute.xlu0 %603
      %605 = vrot.lane.b32.xlu0 %v362, 8
      %v606 = vpop.permute.xlu0 %605
      %607 = vrot.lane.b32.xlu0 %v363, 8
      %v608 = vpop.permute.xlu0 %607
      %609 = vrot.lane.b32.xlu0 %v364, 8
      %v610 = vpop.permute.xlu0 %609
      %627 = vrot.lane.b32.xlu0 %v563, 16
      %v628 = vpop.permute.xlu0 %627
      %629 = vrot.lane.b32.xlu0 %v564, 16
      %v630 = vpop.permute.xlu0 %629
      %631 = vrot.lane.b32.xlu0 %v565, 16
      %v632 = vpop.permute.xlu0 %631
      %633 = vrot.lane.b32.xlu0 %v566, 16
      %v634 = vpop.permute.xlu0 %633
      %635 = vrot.lane.b32.xlu0 %v567, 16
      %v636 = vpop.permute.xlu0 %635
      %637 = vrot.lane.b32.xlu0 %v568, 16
      %v638 = vpop.permute.xlu0 %637
      %639 = vrot.lane.b32.xlu0 %v569, 16
      %v640 = vpop.permute.xlu0 %639
      %641 = vrot.lane.b32.xlu0 %v570, 16
      %v642 = vpop.permute.xlu0 %641
      %643 = vrot.lane.b32.xlu0 %v571, 16
      %v644 = vpop.permute.xlu0 %643
      %645 = vrot.lane.b32.xlu0 %v572, 16
      %v646 = vpop.permute.xlu0 %645
      %647 = vrot.lane.b32.xlu0 %v573, 16
      %v648 = vpop.permute.xlu0 %647
      %649 = vrot.lane.b32.xlu0 %v574, 16
      %v650 = vpop.permute.xlu0 %649
      %651 = vrot.lane.b32.xlu0 %v575, 16
      %v652 = vpop.permute.xlu0 %651
      %653 = vrot.lane.b32.xlu0 %v576, 16
      %v654 = vpop.permute.xlu0 %653
      %655 = vrot.lane.b32.xlu0 %v577, 16
      %v656 = vpop.permute.xlu0 %655
      %657 = vrot.lane.b32.xlu0 %v578, 16
      %v658 = vpop.permute.xlu0 %657
      %vm659 = vcmask 64512
      %v662 = vsel %vm659, %v496, %v580
      %v665 = vsel %vm659, %v497, %v582
      %v668 = vsel %vm659, %v498, %v584
      %v671 = vsel %vm659, %v499, %v586
      %v674 = vsel %vm659, %v500, %v588
      %v677 = vsel %vm659, %v501, %v590
      %v680 = vsel %vm659, %v502, %v592
      %v683 = vsel %vm659, %v503, %v594
      %v686 = vsel %vm659, %v504, %v596
      %v689 = vsel %vm659, %v505, %v598
      %v692 = vsel %vm659, %v506, %v600
      %v695 = vsel %vm659, %v507, %v602
      %v698 = vsel %vm659, %v508, %v604
      %v701 = vsel %vm659, %v509, %v606
      %v704 = vsel %vm659, %v510, %v608
      %v707 = vsel %vm659, %v511, %v610
      %vm708 = vcmask 130048
      %v710 = vsel %vm708, %v662, %v628
      %v713 = vsel %vm708, %v665, %v630
      %v716 = vsel %vm708, %v668, %v632
      %v719 = vsel %vm708, %v671, %v634
      %v722 = vsel %vm708, %v674, %v636
      %v725 = vsel %vm708, %v677, %v638
      %v728 = vsel %vm708, %v680, %v640
      %v731 = vsel %vm708, %v683, %v642
      %v734 = vsel %vm708, %v686, %v644
      %v737 = vsel %vm708, %v689, %v646
      %v740 = vsel %vm708, %v692, %v648
      %v743 = vsel %vm708, %v695, %v650
      %v746 = vsel %vm708, %v698, %v652
      %v749 = vsel %vm708, %v701, %v654
      %v752 = vsel %vm708, %v704, %v656
      %v755 = vsel %vm708, %v707, %v658
      %vm757 = vcmask 195584
      %758 = vst.msk [vmem:[#allocation2] sm:$0xff] %vm757, 0
      %759 = vst.msk [vmem:[#allocation2 + $0x8] sm:$0xff] %vm757, %v710
      %760 = vst.msk [vmem:[#allocation2 + $0x10] sm:$0xff] %vm757, %v713
      %761 = vst.msk [vmem:[#allocation2 + $0x18] sm:$0xff] %vm757, %v716
      %762 = vst.msk [vmem:[#allocation2 + $0x20] sm:$0xff] %vm757, %v719
      %763 = vst.msk [vmem:[#allocation2 + $0x28] sm:$0xff] %vm757, %v722
      %764 = vst.msk [vmem:[#allocation2 + $0x30] sm:$0xff] %vm757, %v725
      %765 = vst.msk [vmem:[#allocation2 + $0x38] sm:$0xff] %vm757, %v728
      %766 = vst.msk [vmem:[#allocation2 + $0x40] sm:$0xff] %vm757, %v731
      %767 = vst.msk [vmem:[#allocation2 + $0x48] sm:$0xff] %vm757, %v734
      %768 = vst.msk [vmem:[#allocation2 + $0x50] sm:$0xff] %vm757, %v737
      %769 = vst.msk [vmem:[#allocation2 + $0x58] sm:$0xff] %vm757, %v740
      %770 = vst.msk [vmem:[#allocation2 + $0x60] sm:$0xff] %vm757, %v743
      %771 = vst.msk [vmem:[#allocation2 + $0x68] sm:$0xff] %vm757, %v746
      %772 = vst.msk [vmem:[#allocation2 + $0x70] sm:$0xff] %vm757, %v749
      %773 = vst.msk [vmem:[#allocation2 + $0x78] sm:$0xff] %vm757, %v752
      %774 = vst.msk [vmem:[#allocation2 + $0x80] sm:$0xff] %vm757, %v755
      %775 = vst.msk [vmem:[#allocation2 + $0x88] sm:$0xff] %vm757, 0
      %v776 = vld [vmem:[#allocation2] sm:$0xff]
      %v777 = vld [vmem:[#allocation2 + $0x8] sm:$0xff]
      %v778 = vld [vmem:[#allocation2 + $0x10] sm:$0xff]
      %v779 = vld [vmem:[#allocation2 + $0x18] sm:$0xff]
      %v780 = vld [vmem:[#allocation2 + $0x20] sm:$0xff]
      %v781 = vld [vmem:[#allocation2 + $0x28] sm:$0xff]
      %v782 = vld [vmem:[#allocation2 + $0x30] sm:$0xff]
      %v783 = vld [vmem:[#allocation2 + $0x38] sm:$0xff]
      %v784 = vld [vmem:[#allocation2 + $0x40] sm:$0xff]
      %v785 = vld [vmem:[#allocation2 + $0x48] sm:$0xff]
      %v786 = vld [vmem:[#allocation2 + $0x50] sm:$0xff]
      %v787 = vld [vmem:[#allocation2 + $0x58] sm:$0xff]
      %v788 = vld [vmem:[#allocation2 + $0x60] sm:$0xff]
      %v789 = vld [vmem:[#allocation2 + $0x68] sm:$0xff]
      %v790 = vld [vmem:[#allocation2 + $0x70] sm:$0xff]
      %v791 = vld [vmem:[#allocation2 + $0x78] sm:$0xff]
      %v792 = vld [vmem:[%s1] sm:$0xf]
      %v793 = vld [vmem:[%s1 + $0x4] sm:$0xf]
      %v794 = vld [vmem:[%s1 + $0x8] sm:$0xf]
      %s795 = scalar_lea.vmem [#allocation2], 8
      %v796 = vld [vmem:[%s795] sm:$0xff]
      %v797 = vld [vmem:[%s795 + $0x8] sm:$0xff]
      %v798 = vld [vmem:[%s795 + $0x10] sm:$0xff]
      %v799 = vld [vmem:[%s795 + $0x18] sm:$0xff]
      %v800 = vld [vmem:[%s795 + $0x20] sm:$0xff]
      %v801 = vld [vmem:[%s795 + $0x28] sm:$0xff]
      %v802 = vld [vmem:[%s795 + $0x30] sm:$0xff]
      %v803 = vld [vmem:[%s795 + $0x38] sm:$0xff]
      %v804 = vld [vmem:[%s795 + $0x40] sm:$0xff]
      %v805 = vld [vmem:[%s795 + $0x48] sm:$0xff]
      %v806 = vld [vmem:[%s795 + $0x50] sm:$0xff]
      %v807 = vld [vmem:[%s795 + $0x58] sm:$0xff]
      %v808 = vld [vmem:[%s795 + $0x60] sm:$0xff]
      %v809 = vld [vmem:[%s795 + $0x68] sm:$0xff]
      %v810 = vld [vmem:[%s795 + $0x70] sm:$0xff]
      %v811 = vld [vmem:[%s795 + $0x78] sm:$0xff]
      %s812 = scalar_lea.vmem %s1, 12
      %v813 = vld [vmem:[%s812] sm:$0xf]
      %v814 = vld [vmem:[%s812 + $0x4] sm:$0xf]
      %v815 = vld [vmem:[%s812 + $0x8] sm:$0xf]
      %v819 = vunpack.c.l.b16 %v813
      %v820 = vunpack.c.l.b16 %v814
      %v821 = vunpack.c.l.b16 %v815
      %v822 = vpack.c.b16 %v820, %v819
      %v823 = vpack.c.b16 %v821, %v821
      %v826 = vsel %vm757, %v796, 0
      %v829 = vsel %vm757, %v797, 0
      %v832 = vsel %vm757, %v798, 0
      %v835 = vsel %vm757, %v799, 0
      %v838 = vsel %vm757, %v800, 0
      %v841 = vsel %vm757, %v801, 0
      %v844 = vsel %vm757, %v802, 0
      %v847 = vsel %vm757, %v803, 0
      %v850 = vsel %vm757, %v804, 0
      %v853 = vsel %vm757, %v805, 0
      %v856 = vsel %vm757, %v806, 0
      %v859 = vsel %vm757, %v807, 0
      %v862 = vsel %vm757, %v808, 0
      %v865 = vsel %vm757, %v809, 0
      %v868 = vsel %vm757, %v810, 0
      %v871 = vsel %vm757, %v811, 0
      %vm873 = vcmask 1043456
      %v875 = vsel %vm873, %v823, 0
      %877 = vmatprep.subr.bf16.mxu0 0
      %878 = vmatpush1.bf16.msra.mxu0 %v822
      %879 = vmatprep.subr.bf16.mxu0 0
      %880 = vmatpush1.bf16.msra.mxu0 %v875
      %881 = vmatprep.subr.bf16.mxu0 0
      %882 = vmatpush1.bf16.msra.mxu0 0
      %883 = vmatprep.subr.bf16.mxu0 0
      %884 = vmatpush1.bf16.msra.mxu0 0
      %885 = vmatprep.subr.bf16.mxu0 0
      %886 = vmatpush1.bf16.msra.mxu0 0
      %887 = vmatprep.subr.bf16.mxu0 0
      %888 = vmatpush1.bf16.msra.mxu0 0
      %889 = vmatprep.subr.bf16.mxu0 0
      %890 = vmatpush1.bf16.msra.mxu0 0
      %891 = vmatprep.subr.bf16.mxu0 0
      %892 = vmatpush1.bf16.msra.mxu0 0
      %893 = vmatprep.subr.bf16.mxu0 0
      %894 = vmatpush1.bf16.msra.mxu0 0
      %895 = vmatprep.subr.bf16.mxu0 0
      %896 = vmatpush1.bf16.msra.mxu0 0
      %897 = vmatprep.subr.bf16.mxu0 0
      %898 = vmatpush1.bf16.msra.mxu0 0
      %899 = vmatprep.subr.bf16.mxu0 0
      %900 = vmatpush1.bf16.msra.mxu0 0
      %901 = vmatprep.subr.bf16.mxu0 0
      %902 = vmatpush1.bf16.msra.mxu0 0
      %903 = vmatprep.subr.bf16.mxu0 0
      %904 = vmatpush1.bf16.msra.mxu0 0
      %905 = vmatprep.subr.bf16.mxu0 0
      %906 = vmatpush1.bf16.msra.mxu0 0
      %907 = vmatprep.subr.bf16.mxu0 0
      %908 = vmatpush1.bf16.msra.mxu0 0
      %909 = vmatprep.mubr.bf16.mxu0 0
      %910 = vmatmul.mubr.bf16.gmra.mrb[0].mxu0 %v826
      %v911 = vpop.f32.mrb[0].mxu0
      %v912 = vadd.f32 0.0, %v911
      %v913 = vpop.f32.mrb[0].mxu0
      %v914 = vpop.f32.mrb[0].mxu0
      %v915 = vadd.f32 0.0, %v914
      %v916 = vpop.f32.mrb[0].mxu0
      %917 = vmatprep.mubr.bf16.mxu0 0
      %918 = vmatmul.mubr.bf16.gmra.mrb[0].mxu0 %v829
      %v919 = vpop.f32.mrb[0].mxu0
      %v920 = vadd.f32 0.0, %v919
      %v921 = vpop.f32.mrb[0].mxu0
      %v922 = vpop.f32.mrb[0].mxu0
      %v923 = vadd.f32 0.0, %v922
      %v924 = vpop.f32.mrb[0].mxu0
      %925 = vmatprep.mubr.bf16.mxu0 0
      %926 = vmatmul.mubr.bf16.gmra.mrb[0].mxu0 %v832
      %v927 = vpop.f32.mrb[0].mxu0
      %v928 = vadd.f32 0.0, %v927
      %v929 = vpop.f32.mrb[0].mxu0
      %v930 = vpop.f32.mrb[0].mxu0
      %v931 = vadd.f32 0.0, %v930
      %v932 = vpop.f32.mrb[0].mxu0
      %933 = vmatprep.mubr.bf16.mxu0 0
      %934 = vmatmul.mubr.bf16.gmra.mrb[0].mxu0 %v835
      %v935 = vpop.f32.mrb[0].mxu0
      %v936 = vadd.f32 0.0, %v935
      %v937 = vpop.f32.mrb[0].mxu0
      %v938 = vpop.f32.mrb[0].mxu0
      %v939 = vadd.f32 0.0, %v938
      %v940 = vpop.f32.mrb[0].mxu0
      %941 = vmatprep.mubr.bf16.mxu0 0
      %942 = vmatmul.mubr.bf16.gmra.mrb[0].mxu0 %v838
      %v943 = vpop.f32.mrb[0].mxu0
      %v944 = vadd.f32 0.0, %v943
      %v945 = vpop.f32.mrb[0].mxu0
      %v946 = vpop.f32.mrb[0].mxu0
      %v947 = vadd.f32 0.0, %v946
      %v948 = vpop.f32.mrb[0].mxu0
      %949 = vmatprep.mubr.bf16.mxu0 0
      %950 = vmatmul.mubr.bf16.gmra.mrb[0].mxu0 %v841
      %v951 = vpop.f32.mrb[0].mxu0
      %v952 = vadd.f32 0.0, %v951
      %v953 = vpop.f32.mrb[0].mxu0
      %v954 = vpop.f32.mrb[0].mxu0
      %v955 = vadd.f32 0.0, %v954
      %v956 = vpop.f32.mrb[0].mxu0
      %957 = vmatprep.mubr.bf16.mxu0 0
      %958 = vmatmul.mubr.bf16.gmra.mrb[0].mxu0 %v844
      %v959 = vpop.f32.mrb[0].mxu0
      %v960 = vadd.f32 0.0, %v959
      %v961 = vpop.f32.mrb[0].mxu0
      %v962 = vpop.f32.mrb[0].mxu0
      %v963 = vadd.f32 0.0, %v962
      %v964 = vpop.f32.mrb[0].mxu0
      %965 = vmatprep.mubr.bf16.mxu0 0
      %966 = vmatmul.mubr.bf16.gmra.mrb[0].mxu0 %v847
      %v967 = vpop.f32.mrb[0].mxu0
      %v968 = vadd.f32 0.0, %v967
      %v969 = vpop.f32.mrb[0].mxu0
      %v970 = vpop.f32.mrb[0].mxu0
      %v971 = vadd.f32 0.0, %v970
      %v972 = vpop.f32.mrb[0].mxu0
      %973 = vmatprep.mubr.bf16.mxu0 0
      %974 = vmatmul.mubr.bf16.gmra.mrb[0].mxu0 %v850
      %v975 = vpop.f32.mrb[0].mxu0
      %v976 = vadd.f32 0.0, %v975
      %v977 = vpop.f32.mrb[0].mxu0
      %v978 = vpop.f32.mrb[0].mxu0
      %v979 = vadd.f32 0.0, %v978
      %v980 = vpop.f32.mrb[0].mxu0
      %981 = vmatprep.mubr.bf16.mxu0 0
      %982 = vmatmul.mubr.bf16.gmra.mrb[0].mxu0 %v853
      %v983 = vpop.f32.mrb[0].mxu0
      %v984 = vadd.f32 0.0, %v983
      %v985 = vpop.f32.mrb[0].mxu0
      %v986 = vpop.f32.mrb[0].mxu0
      %v987 = vadd.f32 0.0, %v986
      %v988 = vpop.f32.mrb[0].mxu0
      %989 = vmatprep.mubr.bf16.mxu0 0
      %990 = vmatmul.mubr.bf16.gmra.mrb[0].mxu0 %v856
      %v991 = vpop.f32.mrb[0].mxu0
      %v992 = vadd.f32 0.0, %v991
      %v993 = vpop.f32.mrb[0].mxu0
      %v994 = vpop.f32.mrb[0].mxu0
      %v995 = vadd.f32 0.0, %v994
      %v996 = vpop.f32.mrb[0].mxu0
      %997 = vmatprep.mubr.bf16.mxu0 0
      %998 = vmatmul.mubr.bf16.gmra.mrb[0].mxu0 %v859
      %v999 = vpop.f32.mrb[0].mxu0
      %v1000 = vadd.f32 0.0, %v999
      %v1001 = vpop.f32.mrb[0].mxu0
      %v1002 = vpop.f32.mrb[0].mxu0
      %v1003 = vadd.f32 0.0, %v1002
      %v1004 = vpop.f32.mrb[0].mxu0
      %1005 = vmatprep.mubr.bf16.mxu0 0
      %1006 = vmatmul.mubr.bf16.gmra.mrb[0].mxu0 %v862
      %v1007 = vpop.f32.mrb[0].mxu0
      %v1008 = vadd.f32 0.0, %v1007
      %v1009 = vpop.f32.mrb[0].mxu0
      %v1010 = vpop.f32.mrb[0].mxu0
      %v1011 = vadd.f32 0.0, %v1010
      %v1012 = vpop.f32.mrb[0].mxu0
      %1013 = vmatprep.mubr.bf16.mxu0 0
      %1014 = vmatmul.mubr.bf16.gmra.mrb[0].mxu0 %v865
      %v1015 = vpop.f32.mrb[0].mxu0
      %v1016 = vadd.f32 0.0, %v1015
      %v1017 = vpop.f32.mrb[0].mxu0
      %v1018 = vpop.f32.mrb[0].mxu0
      %v1019 = vadd.f32 0.0, %v1018
      %v1020 = vpop.f32.mrb[0].mxu0
      %1021 = vmatprep.mubr.bf16.mxu0 0
      %1022 = vmatmul.mubr.bf16.gmra.mrb[0].mxu0 %v868
      %v1023 = vpop.f32.mrb[0].mxu0
      %v1024 = vadd.f32 0.0, %v1023
      %v1025 = vpop.f32.mrb[0].mxu0
      %v1026 = vpop.f32.mrb[0].mxu0
      %v1027 = vadd.f32 0.0, %v1026
      %v1028 = vpop.f32.mrb[0].mxu0
      %1029 = vmatprep.mubr.bf16.mxu0 0
      %1030 = vmatmul.mubr.bf16.gmra.mrb[0].mxu0 %v871
      %v1031 = vpop.f32.mrb[0].mxu0
      %v1032 = vadd.f32 0.0, %v1031
      %v1033 = vpop.f32.mrb[0].mxu0
      %v1034 = vpop.f32.mrb[0].mxu0
      %v1035 = vadd.f32 0.0, %v1034
      %v1036 = vpop.f32.mrb[0].mxu0
      %1037 = vdwg.mxu0
      %v1041 = vunpack.c.l.b16 %v792
      %v1042 = vunpack.c.l.b16 %v793
      %v1043 = vunpack.c.l.b16 %v794
      %v1044 = vpack.c.b16 %v1042, %v1041
      %v1045 = vpack.c.b16 %v1043, %v1043
      %v1048 = vsel %vm757, %v776, 0
      %v1051 = vsel %vm757, %v777, 0
      %v1054 = vsel %vm757, %v778, 0
      %v1057 = vsel %vm757, %v779, 0
      %v1060 = vsel %vm757, %v780, 0
      %v1063 = vsel %vm757, %v781, 0
      %v1066 = vsel %vm757, %v782, 0
      %v1069 = vsel %vm757, %v783, 0
      %v1072 = vsel %vm757, %v784, 0
      %v1075 = vsel %vm757, %v785, 0
      %v1078 = vsel %vm757, %v786, 0
      %v1081 = vsel %vm757, %v787, 0
      %v1084 = vsel %vm757, %v788, 0
      %v1087 = vsel %vm757, %v789, 0
      %v1090 = vsel %vm757, %v790, 0
      %v1093 = vsel %vm757, %v791, 0
      %v1096 = vsel %vm873, %v1045, 0
      %1098 = vmatprep.subr.bf16.mxu0 0
      %1099 = vmatpush1.bf16.msra.mxu0 %v1044
      %1100 = vmatprep.subr.bf16.mxu0 0
      %1101 = vmatpush1.bf16.msra.mxu0 %v1096
      %1102 = vmatprep.subr.bf16.mxu0 0
      %1103 = vmatpush1.bf16.msra.mxu0 0
      %1104 = vmatprep.subr.bf16.mxu0 0
      %1105 = vmatpush1.bf16.msra.mxu0 0
      %1106 = vmatprep.subr.bf16.mxu0 0
      %1107 = vmatpush1.bf16.msra.mxu0 0
      %1108 = vmatprep.subr.bf16.mxu0 0
      %1109 = vmatpush1.bf16.msra.mxu0 0
      %1110 = vmatprep.subr.bf16.mxu0 0
      %1111 = vmatpush1.bf16.msra.mxu0 0
      %1112 = vmatprep.subr.bf16.mxu0 0
      %1113 = vmatpush1.bf16.msra.mxu0 0
      %1114 = vmatprep.subr.bf16.mxu0 0
      %1115 = vmatpush1.bf16.msra.mxu0 0
      %1116 = vmatprep.subr.bf16.mxu0 0
      %1117 = vmatpush1.bf16.msra.mxu0 0
      %1118 = vmatprep.subr.bf16.mxu0 0
      %1119 = vmatpush1.bf16.msra.mxu0 0
      %1120 = vmatprep.subr.bf16.mxu0 0
      %1121 = vmatpush1.bf16.msra.mxu0 0
      %1122 = vmatprep.subr.bf16.mxu0 0
      %1123 = vmatpush1.bf16.msra.mxu0 0
      %1124 = vmatprep.subr.bf16.mxu0 0
      %1125 = vmatpush1.bf16.msra.mxu0 0
      %1126 = vmatprep.subr.bf16.mxu0 0
      %1127 = vmatpush1.bf16.msra.mxu0 0
      %1128 = vmatprep.subr.bf16.mxu0 0
      %1129 = vmatpush1.bf16.msra.mxu0 0
      %1130 = vmatprep.mubr.bf16.mxu0 0
      %1131 = vmatmul.mubr.bf16.gmra.mrb[0].mxu0 %v1048
      %v1132 = vpop.f32.mrb[0].mxu0
      %v1133 = vadd.f32 %v912, %v1132
      %v1134 = vpop.f32.mrb[0].mxu0
      %v1135 = vpop.f32.mrb[0].mxu0
      %v1136 = vadd.f32 %v915, %v1135
      %v1137 = vpop.f32.mrb[0].mxu0
      %1138 = vmatprep.mubr.bf16.mxu0 0
      %1139 = vmatmul.mubr.bf16.gmra.mrb[0].mxu0 %v1051
      %v1140 = vpop.f32.mrb[0].mxu0
      %v1141 = vadd.f32 %v920, %v1140
      %v1142 = vpop.f32.mrb[0].mxu0
      %v1143 = vpop.f32.mrb[0].mxu0
      %v1144 = vadd.f32 %v923, %v1143
      %v1145 = vpop.f32.mrb[0].mxu0
      %1146 = vmatprep.mubr.bf16.mxu0 0
      %1147 = vmatmul.mubr.bf16.gmra.mrb[0].mxu0 %v1054
      %v1148 = vpop.f32.mrb[0].mxu0
      %v1149 = vadd.f32 %v928, %v1148
      %v1150 = vpop.f32.mrb[0].mxu0
      %v1151 = vpop.f32.mrb[0].mxu0
      %v1152 = vadd.f32 %v931, %v1151
      %v1153 = vpop.f32.mrb[0].mxu0
      %1154 = vmatprep.mubr.bf16.mxu0 0
      %1155 = vmatmul.mubr.bf16.gmra.mrb[0].mxu0 %v1057
      %v1156 = vpop.f32.mrb[0].mxu0
      %v1157 = vadd.f32 %v936, %v1156
      %v1158 = vpop.f32.mrb[0].mxu0
      %v1159 = vpop.f32.mrb[0].mxu0
      %v1160 = vadd.f32 %v939, %v1159
      %v1161 = vpop.f32.mrb[0].mxu0
      %1162 = vmatprep.mubr.bf16.mxu0 0
      %1163 = vmatmul.mubr.bf16.gmra.mrb[0].mxu0 %v1060
      %v1164 = vpop.f32.mrb[0].mxu0
      %v1165 = vadd.f32 %v944, %v1164
      %v1166 = vpop.f32.mrb[0].mxu0
      %v1167 = vpop.f32.mrb[0].mxu0
      %v1168 = vadd.f32 %v947, %v1167
      %v1169 = vpop.f32.mrb[0].mxu0
      %1170 = vmatprep.mubr.bf16.mxu0 0
      %1171 = vmatmul.mubr.bf16.gmra.mrb[0].mxu0 %v1063
      %v1172 = vpop.f32.mrb[0].mxu0
      %v1173 = vadd.f32 %v952, %v1172
      %v1174 = vpop.f32.mrb[0].mxu0
      %v1175 = vpop.f32.mrb[0].mxu0
      %v1176 = vadd.f32 %v955, %v1175
      %v1177 = vpop.f32.mrb[0].mxu0
      %1178 = vmatprep.mubr.bf16.mxu0 0
      %1179 = vmatmul.mubr.bf16.gmra.mrb[0].mxu0 %v1066
      %v1180 = vpop.f32.mrb[0].mxu0
      %v1181 = vadd.f32 %v960, %v1180
      %v1182 = vpop.f32.mrb[0].mxu0
      %v1183 = vpop.f32.mrb[0].mxu0
      %v1184 = vadd.f32 %v963, %v1183
      %v1185 = vpop.f32.mrb[0].mxu0
      %1186 = vmatprep.mubr.bf16.mxu0 0
      %1187 = vmatmul.mubr.bf16.gmra.mrb[0].mxu0 %v1069
      %v1188 = vpop.f32.mrb[0].mxu0
      %v1189 = vadd.f32 %v968, %v1188
      %v1190 = vpop.f32.mrb[0].mxu0
      %v1191 = vpop.f32.mrb[0].mxu0
      %v1192 = vadd.f32 %v971, %v1191
      %v1193 = vpop.f32.mrb[0].mxu0
      %1194 = vmatprep.mubr.bf16.mxu0 0
      %1195 = vmatmul.mubr.bf16.gmra.mrb[0].mxu0 %v1072
      %v1196 = vpop.f32.mrb[0].mxu0
      %v1197 = vadd.f32 %v976, %v1196
      %v1198 = vpop.f32.mrb[0].mxu0
      %v1199 = vpop.f32.mrb[0].mxu0
      %v1200 = vadd.f32 %v979, %v1199
      %v1201 = vpop.f32.mrb[0].mxu0
      %1202 = vmatprep.mubr.bf16.mxu0 0
      %1203 = vmatmul.mubr.bf16.gmra.mrb[0].mxu0 %v1075
      %v1204 = vpop.f32.mrb[0].mxu0
      %v1205 = vadd.f32 %v984, %v1204
      %v1206 = vpop.f32.mrb[0].mxu0
      %v1207 = vpop.f32.mrb[0].mxu0
      %v1208 = vadd.f32 %v987, %v1207
      %v1209 = vpop.f32.mrb[0].mxu0
      %1210 = vmatprep.mubr.bf16.mxu0 0
      %1211 = vmatmul.mubr.bf16.gmra.mrb[0].mxu0 %v1078
      %v1212 = vpop.f32.mrb[0].mxu0
      %v1213 = vadd.f32 %v992, %v1212
      %v1214 = vpop.f32.mrb[0].mxu0
      %v1215 = vpop.f32.mrb[0].mxu0
      %v1216 = vadd.f32 %v995, %v1215
      %v1217 = vpop.f32.mrb[0].mxu0
      %1218 = vmatprep.mubr.bf16.mxu0 0
      %1219 = vmatmul.mubr.bf16.gmra.mrb[0].mxu0 %v1081
      %v1220 = vpop.f32.mrb[0].mxu0
      %v1221 = vadd.f32 %v1000, %v1220
      %v1222 = vpop.f32.mrb[0].mxu0
      %v1223 = vpop.f32.mrb[0].mxu0
      %v1224 = vadd.f32 %v1003, %v1223
      %v1225 = vpop.f32.mrb[0].mxu0
      %1226 = vmatprep.mubr.bf16.mxu0 0
      %1227 = vmatmul.mubr.bf16.gmra.mrb[0].mxu0 %v1084
      %v1228 = vpop.f32.mrb[0].mxu0
      %v1229 = vadd.f32 %v1008, %v1228
      %v1230 = vpop.f32.mrb[0].mxu0
      %v1231 = vpop.f32.mrb[0].mxu0
      %v1232 = vadd.f32 %v1011, %v1231
      %v1233 = vpop.f32.mrb[0].mxu0
      %1234 = vmatprep.mubr.bf16.mxu0 0
      %1235 = vmatmul.mubr.bf16.gmra.mrb[0].mxu0 %v1087
      %v1236 = vpop.f32.mrb[0].mxu0
      %v1237 = vadd.f32 %v1016, %v1236
      %v1238 = vpop.f32.mrb[0].mxu0
      %v1239 = vpop.f32.mrb[0].mxu0
      %v1240 = vadd.f32 %v1019, %v1239
      %v1241 = vpop.f32.mrb[0].mxu0
      %1242 = vmatprep.mubr.bf16.mxu0 0
      %1243 = vmatmul.mubr.bf16.gmra.mrb[0].mxu0 %v1090
      %v1244 = vpop.f32.mrb[0].mxu0
      %v1245 = vadd.f32 %v1024, %v1244
      %v1246 = vpop.f32.mrb[0].mxu0
      %v1247 = vpop.f32.mrb[0].mxu0
      %v1248 = vadd.f32 %v1027, %v1247
      %v1249 = vpop.f32.mrb[0].mxu0
      %1250 = vmatprep.mubr.bf16.mxu0 0
      %1251 = vmatmul.mubr.bf16.gmra.mrb[0].mxu0 %v1093
      %v1252 = vpop.f32.mrb[0].mxu0
      %v1253 = vadd.f32 %v1032, %v1252
      %v1254 = vpop.f32.mrb[0].mxu0
      %v1255 = vpop.f32.mrb[0].mxu0
      %v1256 = vadd.f32 %v1035, %v1255
      %v1257 = vpop.f32.mrb[0].mxu0
      %1258 = vdwg.mxu0
      %v1259 = vld [vmem:[%s5] sm:$0xf]
      %v1260 = vld [vmem:[%s5 + $0x4] sm:$0xf]
      %v1261 = vld [vmem:[%s5 + $0x8] sm:$0xf]
      %v1265 = vunpack.c.l.b16 %v1259
      %v1266 = vunpack.c.l.b16 %v1260
      %v1267 = vunpack.c.l.b16 %v1261
      %v1268 = vpack.c.b16 %v1266, %v1265
      %v1269 = vpack.c.b16 %v1267, %v1267
      %v1272 = vsel %vm873, %v1269, 0
      %1274 = vmatprep.subr.bf16.mxu0 0
      %1275 = vmatpush1.bf16.msra.mxu0 %v1268
      %1276 = vmatprep.subr.bf16.mxu0 0
      %1277 = vmatpush1.bf16.msra.mxu0 %v1272
      %1278 = vmatprep.subr.bf16.mxu0 0
      %1279 = vmatpush1.bf16.msra.mxu0 0
      %1280 = vmatprep.subr.bf16.mxu0 0
      %1281 = vmatpush1.bf16.msra.mxu0 0
      %1282 = vmatprep.subr.bf16.mxu0 0
      %1283 = vmatpush1.bf16.msra.mxu0 0
      %1284 = vmatprep.subr.bf16.mxu0 0
      %1285 = vmatpush1.bf16.msra.mxu0 0
      %1286 = vmatprep.subr.bf16.mxu0 0
      %1287 = vmatpush1.bf16.msra.mxu0 0
      %1288 = vmatprep.subr.bf16.mxu0 0
      %1289 = vmatpush1.bf16.msra.mxu0 0
      %1290 = vmatprep.subr.bf16.mxu0 0
      %1291 = vmatpush1.bf16.msra.mxu0 0
      %1292 = vmatprep.subr.bf16.mxu0 0
      %1293 = vmatpush1.bf16.msra.mxu0 0
      %1294 = vmatprep.subr.bf16.mxu0 0
      %1295 = vmatpush1.bf16.msra.mxu0 0
      %1296 = vmatprep.subr.bf16.mxu0 0
      %1297 = vmatpush1.bf16.msra.mxu0 0
      %1298 = vmatprep.subr.bf16.mxu0 0
      %1299 = vmatpush1.bf16.msra.mxu0 0
      %1300 = vmatprep.subr.bf16.mxu0 0
      %1301 = vmatpush1.bf16.msra.mxu0 0
      %1302 = vmatprep.subr.bf16.mxu0 0
      %1303 = vmatpush1.bf16.msra.mxu0 0
      %1304 = vmatprep.subr.bf16.mxu0 0
      %1305 = vmatpush1.bf16.msra.mxu0 0
      %1306 = vmatprep.mubr.bf16.mxu0 0
      %1307 = vmatmul.mubr.bf16.gmra.mrb[0].mxu0 %v826
      %v1308 = vpop.f32.mrb[0].mxu0
      %v1309 = vadd.f32 0.0, %v1308
      %v1310 = vpop.f32.mrb[0].mxu0
      %v1311 = vpop.f32.mrb[0].mxu0
      %v1312 = vadd.f32 0.0, %v1311
      %v1313 = vpop.f32.mrb[0].mxu0
      %1314 = vmatprep.mubr.bf16.mxu0 0
      %1315 = vmatmul.mubr.bf16.gmra.mrb[0].mxu0 %v829
      %v1316 = vpop.f32.mrb[0].mxu0
      %v1317 = vadd.f32 0.0, %v1316
      %v1318 = vpop.f32.mrb[0].mxu0
      %v1319 = vpop.f32.mrb[0].mxu0
      %v1320 = vadd.f32 0.0, %v1319
      %v1321 = vpop.f32.mrb[0].mxu0
      %1322 = vmatprep.mubr.bf16.mxu0 0
      %1323 = vmatmul.mubr.bf16.gmra.mrb[0].mxu0 %v832
      %v1324 = vpop.f32.mrb[0].mxu0
      %v1325 = vadd.f32 0.0, %v1324
      %v1326 = vpop.f32.mrb[0].mxu0
      %v1327 = vpop.f32.mrb[0].mxu0
      %v1328 = vadd.f32 0.0, %v1327
      %v1329 = vpop.f32.mrb[0].mxu0
      %1330 = vmatprep.mubr.bf16.mxu0 0
      %1331 = vmatmul.mubr.bf16.gmra.mrb[0].mxu0 %v835
      %v1332 = vpop.f32.mrb[0].mxu0
      %v1333 = vadd.f32 0.0, %v1332
      %v1334 = vpop.f32.mrb[0].mxu0
      %v1335 = vpop.f32.mrb[0].mxu0
      %v1336 = vadd.f32 0.0, %v1335
      %v1337 = vpop.f32.mrb[0].mxu0
      %1338 = vmatprep.mubr.bf16.mxu0 0
      %1339 = vmatmul.mubr.bf16.gmra.mrb[0].mxu0 %v838
      %v1340 = vpop.f32.mrb[0].mxu0
      %v1341 = vadd.f32 0.0, %v1340
      %v1342 = vpop.f32.mrb[0].mxu0
      %v1343 = vpop.f32.mrb[0].mxu0
      %v1344 = vadd.f32 0.0, %v1343
      %v1345 = vpop.f32.mrb[0].mxu0
      %1346 = vmatprep.mubr.bf16.mxu0 0
      %1347 = vmatmul.mubr.bf16.gmra.mrb[0].mxu0 %v841
      %v1348 = vpop.f32.mrb[0].mxu0
      %v1349 = vadd.f32 0.0, %v1348
      %v1350 = vpop.f32.mrb[0].mxu0
      %v1351 = vpop.f32.mrb[0].mxu0
      %v1352 = vadd.f32 0.0, %v1351
      %v1353 = vpop.f32.mrb[0].mxu0
      %1354 = vmatprep.mubr.bf16.mxu0 0
      %1355 = vmatmul.mubr.bf16.gmra.mrb[0].mxu0 %v844
      %v1356 = vpop.f32.mrb[0].mxu0
      %v1357 = vadd.f32 0.0, %v1356
      %v1358 = vpop.f32.mrb[0].mxu0
      %v1359 = vpop.f32.mrb[0].mxu0
      %v1360 = vadd.f32 0.0, %v1359
      %v1361 = vpop.f32.mrb[0].mxu0
      %1362 = vmatprep.mubr.bf16.mxu0 0
      %1363 = vmatmul.mubr.bf16.gmra.mrb[0].mxu0 %v847
      %v1364 = vpop.f32.mrb[0].mxu0
      %v1365 = vadd.f32 0.0, %v1364
      %v1366 = vpop.f32.mrb[0].mxu0
      %v1367 = vpop.f32.mrb[0].mxu0
      %v1368 = vadd.f32 0.0, %v1367
      %v1369 = vpop.f32.mrb[0].mxu0
      %1370 = vmatprep.mubr.bf16.mxu0 0
      %1371 = vmatmul.mubr.bf16.gmra.mrb[0].mxu0 %v850
      %v1372 = vpop.f32.mrb[0].mxu0
      %v1373 = vadd.f32 0.0, %v1372
      %v1374 = vpop.f32.mrb[0].mxu0
      %v1375 = vpop.f32.mrb[0].mxu0
      %v1376 = vadd.f32 0.0, %v1375
      %v1377 = vpop.f32.mrb[0].mxu0
      %1378 = vmatprep.mubr.bf16.mxu0 0
      %1379 = vmatmul.mubr.bf16.gmra.mrb[0].mxu0 %v853
      %v1380 = vpop.f32.mrb[0].mxu0
      %v1381 = vadd.f32 0.0, %v1380
      %v1382 = vpop.f32.mrb[0].mxu0
      %v1383 = vpop.f32.mrb[0].mxu0
      %v1384 = vadd.f32 0.0, %v1383
      %v1385 = vpop.f32.mrb[0].mxu0
      %1386 = vmatprep.mubr.bf16.mxu0 0
      %1387 = vmatmul.mubr.bf16.gmra.mrb[0].mxu0 %v856
      %v1388 = vpop.f32.mrb[0].mxu0
      %v1389 = vadd.f32 0.0, %v1388
      %v1390 = vpop.f32.mrb[0].mxu0
      %v1391 = vpop.f32.mrb[0].mxu0
      %v1392 = vadd.f32 0.0, %v1391
      %v1393 = vpop.f32.mrb[0].mxu0
      %1394 = vmatprep.mubr.bf16.mxu0 0
      %1395 = vmatmul.mubr.bf16.gmra.mrb[0].mxu0 %v859
      %v1396 = vpop.f32.mrb[0].mxu0
      %v1397 = vadd.f32 0.0, %v1396
      %v1398 = vpop.f32.mrb[0].mxu0
      %v1399 = vpop.f32.mrb[0].mxu0
      %v1400 = vadd.f32 0.0, %v1399
      %v1401 = vpop.f32.mrb[0].mxu0
      %1402 = vmatprep.mubr.bf16.mxu0 0
      %1403 = vmatmul.mubr.bf16.gmra.mrb[0].mxu0 %v862
      %v1404 = vpop.f32.mrb[0].mxu0
      %v1405 = vadd.f32 0.0, %v1404
      %v1406 = vpop.f32.mrb[0].mxu0
      %v1407 = vpop.f32.mrb[0].mxu0
      %v1408 = vadd.f32 0.0, %v1407
      %v1409 = vpop.f32.mrb[0].mxu0
      %1410 = vmatprep.mubr.bf16.mxu0 0
      %1411 = vmatmul.mubr.bf16.gmra.mrb[0].mxu0 %v865
      %v1412 = vpop.f32.mrb[0].mxu0
      %v1413 = vadd.f32 0.0, %v1412
      %v1414 = vpop.f32.mrb[0].mxu0
      %v1415 = vpop.f32.mrb[0].mxu0
      %v1416 = vadd.f32 0.0, %v1415
      %v1417 = vpop.f32.mrb[0].mxu0
      %1418 = vmatprep.mubr.bf16.mxu0 0
      %1419 = vmatmul.mubr.bf16.gmra.mrb[0].mxu0 %v868
      %v1420 = vpop.f32.mrb[0].mxu0
      %v1421 = vadd.f32 0.0, %v1420
      %v1422 = vpop.f32.mrb[0].mxu0
      %v1423 = vpop.f32.mrb[0].mxu0
      %v1424 = vadd.f32 0.0, %v1423
      %v1425 = vpop.f32.mrb[0].mxu0
      %1426 = vmatprep.mubr.bf16.mxu0 0
      %1427 = vmatmul.mubr.bf16.gmra.mrb[0].mxu0 %v871
      %v1428 = vpop.f32.mrb[0].mxu0
      %v1429 = vadd.f32 0.0, %v1428
      %v1430 = vpop.f32.mrb[0].mxu0
      %v1431 = vpop.f32.mrb[0].mxu0
      %v1432 = vadd.f32 0.0, %v1431
      %v1433 = vpop.f32.mrb[0].mxu0
      %1434 = vdwg.mxu0
      %s1435 = scalar_lea.vmem [#allocation2], 16
      %v1436 = vld [vmem:[%s1435] sm:$0xff]
      %v1437 = vld [vmem:[%s1435 + $0x8] sm:$0xff]
      %v1438 = vld [vmem:[%s1435 + $0x10] sm:$0xff]
      %v1439 = vld [vmem:[%s1435 + $0x18] sm:$0xff]
      %v1440 = vld [vmem:[%s1435 + $0x20] sm:$0xff]
      %v1441 = vld [vmem:[%s1435 + $0x28] sm:$0xff]
      %v1442 = vld [vmem:[%s1435 + $0x30] sm:$0xff]
      %v1443 = vld [vmem:[%s1435 + $0x38] sm:$0xff]
      %v1444 = vld [vmem:[%s1435 + $0x40] sm:$0xff]
      %v1445 = vld [vmem:[%s1435 + $0x48] sm:$0xff]
      %v1446 = vld [vmem:[%s1435 + $0x50] sm:$0xff]
      %v1447 = vld [vmem:[%s1435 + $0x58] sm:$0xff]
      %v1448 = vld [vmem:[%s1435 + $0x60] sm:$0xff]
      %v1449 = vld [vmem:[%s1435 + $0x68] sm:$0xff]
      %v1450 = vld [vmem:[%s1435 + $0x70] sm:$0xff]
      %v1451 = vld [vmem:[%s1435 + $0x78] sm:$0xff]
      %s1452 = scalar_lea.vmem %s1, 24
      %v1453 = vld [vmem:[%s1452] sm:$0xf]
      %v1454 = vld [vmem:[%s1452 + $0x4] sm:$0xf]
      %v1455 = vld [vmem:[%s1452 + $0x8] sm:$0xf]
      %v1459 = vunpack.c.l.b16 %v1453
      %v1460 = vunpack.c.l.b16 %v1454
      %v1461 = vunpack.c.l.b16 %v1455
      %v1462 = vpack.c.b16 %v1460, %v1459
      %v1463 = vpack.c.b16 %v1461, %v1461
      %v1466 = vsel %vm757, %v1436, 0
      %v1469 = vsel %vm757, %v1437, 0
      %v1472 = vsel %vm757, %v1438, 0
      %v1475 = vsel %vm757, %v1439, 0
      %v1478 = vsel %vm757, %v1440, 0
      %v1481 = vsel %vm757, %v1441, 0
      %v1484 = vsel %vm757, %v1442, 0
      %v1487 = vsel %vm757, %v1443, 0
      %v1490 = vsel %vm757, %v1444, 0
      %v1493 = vsel %vm757, %v1445, 0
      %v1496 = vsel %vm757, %v1446, 0
      %v1499 = vsel %vm757, %v1447, 0
      %v1502 = vsel %vm757, %v1448, 0
      %v1505 = vsel %vm757, %v1449, 0
      %v1508 = vsel %vm757, %v1450, 0
      %v1511 = vsel %vm757, %v1451, 0
      %v1514 = vsel %vm873, %v1463, 0
      %1516 = vmatprep.subr.bf16.mxu0 0
      %1517 = vmatpush1.bf16.msra.mxu0 %v1462
      %1518 = vmatprep.subr.bf16.mxu0 0
      %1519 = vmatpush1.bf16.msra.mxu0 %v1514
      %1520 = vmatprep.subr.bf16.mxu0 0
      %1521 = vmatpush1.bf16.msra.mxu0 0
      %1522 = vmatprep.subr.bf16.mxu0 0
      %1523 = vmatpush1.bf16.msra.mxu0 0
      %1524 = vmatprep.subr.bf16.mxu0 0
      %1525 = vmatpush1.bf16.msra.mxu0 0
      %1526 = vmatprep.subr.bf16.mxu0 0
      %1527 = vmatpush1.bf16.msra.mxu0 0
      %1528 = vmatprep.subr.bf16.mxu0 0
      %1529 = vmatpush1.bf16.msra.mxu0 0
      %1530 = vmatprep.subr.bf16.mxu0 0
      %1531 = vmatpush1.bf16.msra.mxu0 0
      %1532 = vmatprep.subr.bf16.mxu0 0
      %1533 = vmatpush1.bf16.msra.mxu0 0
      %1534 = vmatprep.subr.bf16.mxu0 0
      %1535 = vmatpush1.bf16.msra.mxu0 0
      %1536 = vmatprep.subr.bf16.mxu0 0
      %1537 = vmatpush1.bf16.msra.mxu0 0
      %1538 = vmatprep.subr.bf16.mxu0 0
      %1539 = vmatpush1.bf16.msra.mxu0 0
      %1540 = vmatprep.subr.bf16.mxu0 0
      %1541 = vmatpush1.bf16.msra.mxu0 0
      %1542 = vmatprep.subr.bf16.mxu0 0
      %1543 = vmatpush1.bf16.msra.mxu0 0
      %1544 = vmatprep.subr.bf16.mxu0 0
      %1545 = vmatpush1.bf16.msra.mxu0 0
      %1546 = vmatprep.subr.bf16.mxu0 0
      %1547 = vmatpush1.bf16.msra.mxu0 0
      %1548 = vmatprep.mubr.bf16.mxu0 0
      %1549 = vmatmul.mubr.bf16.gmra.mrb[0].mxu0 %v1466
      %v1550 = vpop.f32.mrb[0].mxu0
      %v1551 = vadd.f32 0.0, %v1550
      %v1552 = vpop.f32.mrb[0].mxu0
      %v1553 = vpop.f32.mrb[0].mxu0
      %v1554 = vadd.f32 0.0, %v1553
      %v1555 = vpop.f32.mrb[0].mxu0
      %1556 = vmatprep.mubr.bf16.mxu0 0
      %1557 = vmatmul.mubr.bf16.gmra.mrb[0].mxu0 %v1469
      %v1558 = vpop.f32.mrb[0].mxu0
      %v1559 = vadd.f32 0.0, %v1558
      %v1560 = vpop.f32.mrb[0].mxu0
      %v1561 = vpop.f32.mrb[0].mxu0
      %v1562 = vadd.f32 0.0, %v1561
      %v1563 = vpop.f32.mrb[0].mxu0
      %1564 = vmatprep.mubr.bf16.mxu0 0
      %1565 = vmatmul.mubr.bf16.gmra.mrb[0].mxu0 %v1472
      %v1566 = vpop.f32.mrb[0].mxu0
      %v1567 = vadd.f32 0.0, %v1566
      %v1568 = vpop.f32.mrb[0].mxu0
      %v1569 = vpop.f32.mrb[0].mxu0
      %v1570 = vadd.f32 0.0, %v1569
      %v1571 = vpop.f32.mrb[0].mxu0
      %1572 = vmatprep.mubr.bf16.mxu0 0
      %1573 = vmatmul.mubr.bf16.gmra.mrb[0].mxu0 %v1475
      %v1574 = vpop.f32.mrb[0].mxu0
      %v1575 = vadd.f32 0.0, %v1574
      %v1576 = vpop.f32.mrb[0].mxu0
      %v1577 = vpop.f32.mrb[0].mxu0
      %v1578 = vadd.f32 0.0, %v1577
      %v1579 = vpop.f32.mrb[0].mxu0
      %1580 = vmatprep.mubr.bf16.mxu0 0
      %1581 = vmatmul.mubr.bf16.gmra.mrb[0].mxu0 %v1478
      %v1582 = vpop.f32.mrb[0].mxu0
      %v1583 = vadd.f32 0.0, %v1582
      %v1584 = vpop.f32.mrb[0].mxu0
      %v1585 = vpop.f32.mrb[0].mxu0
      %v1586 = vadd.f32 0.0, %v1585
      %v1587 = vpop.f32.mrb[0].mxu0
      %1588 = vmatprep.mubr.bf16.mxu0 0
      %1589 = vmatmul.mubr.bf16.gmra.mrb[0].mxu0 %v1481
      %v1590 = vpop.f32.mrb[0].mxu0
      %v1591 = vadd.f32 0.0, %v1590
      %v1592 = vpop.f32.mrb[0].mxu0
      %v1593 = vpop.f32.mrb[0].mxu0
      %v1594 = vadd.f32 0.0, %v1593
      %v1595 = vpop.f32.mrb[0].mxu0
      %1596 = vmatprep.mubr.bf16.mxu0 0
      %1597 = vmatmul.mubr.bf16.gmra.mrb[0].mxu0 %v1484
      %v1598 = vpop.f32.mrb[0].mxu0
      %v1599 = vadd.f32 0.0, %v1598
      %v1600 = vpop.f32.mrb[0].mxu0
      %v1601 = vpop.f32.mrb[0].mxu0
      %v1602 = vadd.f32 0.0, %v1601
      %v1603 = vpop.f32.mrb[0].mxu0
      %1604 = vmatprep.mubr.bf16.mxu0 0
      %1605 = vmatmul.mubr.bf16.gmra.mrb[0].mxu0 %v1487
      %v1606 = vpop.f32.mrb[0].mxu0
      %v1607 = vadd.f32 0.0, %v1606
      %v1608 = vpop.f32.mrb[0].mxu0
      %v1609 = vpop.f32.mrb[0].mxu0
      %v1610 = vadd.f32 0.0, %v1609
      %v1611 = vpop.f32.mrb[0].mxu0
      %1612 = vmatprep.mubr.bf16.mxu0 0
      %1613 = vmatmul.mubr.bf16.gmra.mrb[0].mxu0 %v1490
      %v1614 = vpop.f32.mrb[0].mxu0
      %v1615 = vadd.f32 0.0, %v1614
      %v1616 = vpop.f32.mrb[0].mxu0
      %v1617 = vpop.f32.mrb[0].mxu0
      %v1618 = vadd.f32 0.0, %v1617
      %v1619 = vpop.f32.mrb[0].mxu0
      %1620 = vmatprep.mubr.bf16.mxu0 0
      %1621 = vmatmul.mubr.bf16.gmra.mrb[0].mxu0 %v1493
      %v1622 = vpop.f32.mrb[0].mxu0
      %v1623 = vadd.f32 0.0, %v1622
      %v1624 = vpop.f32.mrb[0].mxu0
      %v1625 = vpop.f32.mrb[0].mxu0
      %v1626 = vadd.f32 0.0, %v1625
      %v1627 = vpop.f32.mrb[0].mxu0
      %1628 = vmatprep.mubr.bf16.mxu0 0
      %1629 = vmatmul.mubr.bf16.gmra.mrb[0].mxu0 %v1496
      %v1630 = vpop.f32.mrb[0].mxu0
      %v1631 = vadd.f32 0.0, %v1630
      %v1632 = vpop.f32.mrb[0].mxu0
      %v1633 = vpop.f32.mrb[0].mxu0
      %v1634 = vadd.f32 0.0, %v1633
      %v1635 = vpop.f32.mrb[0].mxu0
      %1636 = vmatprep.mubr.bf16.mxu0 0
      %1637 = vmatmul.mubr.bf16.gmra.mrb[0].mxu0 %v1499
      %v1638 = vpop.f32.mrb[0].mxu0
      %v1639 = vadd.f32 0.0, %v1638
      %v1640 = vpop.f32.mrb[0].mxu0
      %v1641 = vpop.f32.mrb[0].mxu0
      %v1642 = vadd.f32 0.0, %v1641
      %v1643 = vpop.f32.mrb[0].mxu0
      %1644 = vmatprep.mubr.bf16.mxu0 0
      %1645 = vmatmul.mubr.bf16.gmra.mrb[0].mxu0 %v1502
      %v1646 = vpop.f32.mrb[0].mxu0
      %v1647 = vadd.f32 0.0, %v1646
      %v1648 = vpop.f32.mrb[0].mxu0
      %v1649 = vpop.f32.mrb[0].mxu0
      %v1650 = vadd.f32 0.0, %v1649
      %v1651 = vpop.f32.mrb[0].mxu0
      %1652 = vmatprep.mubr.bf16.mxu0 0
      %1653 = vmatmul.mubr.bf16.gmra.mrb[0].mxu0 %v1505
      %v1654 = vpop.f32.mrb[0].mxu0
      %v1655 = vadd.f32 0.0, %v1654
      %v1656 = vpop.f32.mrb[0].mxu0
      %v1657 = vpop.f32.mrb[0].mxu0
      %v1658 = vadd.f32 0.0, %v1657
      %v1659 = vpop.f32.mrb[0].mxu0
      %1660 = vmatprep.mubr.bf16.mxu0 0
      %1661 = vmatmul.mubr.bf16.gmra.mrb[0].mxu0 %v1508
      %v1662 = vpop.f32.mrb[0].mxu0
      %v1663 = vadd.f32 0.0, %v1662
      %v1664 = vpop.f32.mrb[0].mxu0
      %v1665 = vpop.f32.mrb[0].mxu0
      %v1666 = vadd.f32 0.0, %v1665
      %v1667 = vpop.f32.mrb[0].mxu0
      %1668 = vmatprep.mubr.bf16.mxu0 0
      %1669 = vmatmul.mubr.bf16.gmra.mrb[0].mxu0 %v1511
      %v1670 = vpop.f32.mrb[0].mxu0
      %v1671 = vadd.f32 0.0, %v1670
      %v1672 = vpop.f32.mrb[0].mxu0
      %v1673 = vpop.f32.mrb[0].mxu0
      %v1674 = vadd.f32 0.0, %v1673
      %v1675 = vpop.f32.mrb[0].mxu0
      %1676 = vdwg.mxu0
      %v1677 = vadd.f32 %v1133, %v1551
      %v1678 = vadd.f32 %v1136, %v1554
      %v1679 = vadd.f32 %v1141, %v1559
      %v1680 = vadd.f32 %v1144, %v1562
      %v1681 = vadd.f32 %v1149, %v1567
      %v1682 = vadd.f32 %v1152, %v1570
      %v1683 = vadd.f32 %v1157, %v1575
      %v1684 = vadd.f32 %v1160, %v1578
      %v1685 = vadd.f32 %v1165, %v1583
      %v1686 = vadd.f32 %v1168, %v1586
      %v1687 = vadd.f32 %v1173, %v1591
      %v1688 = vadd.f32 %v1176, %v1594
      %v1689 = vadd.f32 %v1181, %v1599
      %v1690 = vadd.f32 %v1184, %v1602
      %v1691 = vadd.f32 %v1189, %v1607
      %v1692 = vadd.f32 %v1192, %v1610
      %v1693 = vadd.f32 %v1197, %v1615
      %v1694 = vadd.f32 %v1200, %v1618
      %v1695 = vadd.f32 %v1205, %v1623
      %v1696 = vadd.f32 %v1208, %v1626
      %v1697 = vadd.f32 %v1213, %v1631
      %v1698 = vadd.f32 %v1216, %v1634
      %v1699 = vadd.f32 %v1221, %v1639
      %v1700 = vadd.f32 %v1224, %v1642
      %v1701 = vadd.f32 %v1229, %v1647
      %v1702 = vadd.f32 %v1232, %v1650
      %v1703 = vadd.f32 %v1237, %v1655
      %v1704 = vadd.f32 %v1240, %v1658
      %v1705 = vadd.f32 %v1245, %v1663
      %v1706 = vadd.f32 %v1248, %v1666
      %v1707 = vadd.f32 %v1253, %v1671
      %v1708 = vadd.f32 %v1256, %v1674
      %v1709 = vld [vmem:[%s2] sm:$0x1]
      %v1711 = vlaneseq
      %v1712 = vshrl.u32 %v1711, 7
      %v1713 = vsub.s32 0, %v1712
      %v1714 = vrot.slane %v1709, %v1713
      %v1716 = vadd.f32 %v1677, %v1714
      %v1717 = vadd.f32 %v1678, %v1714
      %v1718 = vadd.f32 %v1679, %v1714
      %v1719 = vadd.f32 %v1680, %v1714
      %v1720 = vadd.f32 %v1681, %v1714
      %v1721 = vadd.f32 %v1682, %v1714
      %v1722 = vadd.f32 %v1683, %v1714
      %v1723 = vadd.f32 %v1684, %v1714
      %v1724 = vadd.f32 %v1685, %v1714
      %v1725 = vadd.f32 %v1686, %v1714
      %v1726 = vadd.f32 %v1687, %v1714
      %v1727 = vadd.f32 %v1688, %v1714
      %v1728 = vadd.f32 %v1689, %v1714
      %v1729 = vadd.f32 %v1690, %v1714
      %v1730 = vadd.f32 %v1691, %v1714
      %v1731 = vadd.f32 %v1692, %v1714
      %v1732 = vadd.f32 %v1693, %v1714
      %v1733 = vadd.f32 %v1694, %v1714
      %v1734 = vadd.f32 %v1695, %v1714
      %v1735 = vadd.f32 %v1696, %v1714
      %v1736 = vadd.f32 %v1697, %v1714
      %v1737 = vadd.f32 %v1698, %v1714
      %v1738 = vadd.f32 %v1699, %v1714
      %v1739 = vadd.f32 %v1700, %v1714
      %v1740 = vadd.f32 %v1701, %v1714
      %v1741 = vadd.f32 %v1702, %v1714
      %v1742 = vadd.f32 %v1703, %v1714
      %v1743 = vadd.f32 %v1704, %v1714
      %v1744 = vadd.f32 %v1705, %v1714
      %v1745 = vadd.f32 %v1706, %v1714
      %v1746 = vadd.f32 %v1707, %v1714
      %v1747 = vadd.f32 %v1708, %v1714
      %v1748 = vmax.f32 %v1716, 0.0
      %v1749 = vmax.f32 %v1717, 0.0
      %v1750 = vmax.f32 %v1718, 0.0
      %v1751 = vmax.f32 %v1719, 0.0
      %v1752 = vmax.f32 %v1720, 0.0
      %v1753 = vmax.f32 %v1721, 0.0
      %v1754 = vmax.f32 %v1722, 0.0
      %v1755 = vmax.f32 %v1723, 0.0
      %v1756 = vmax.f32 %v1724, 0.0
      %v1757 = vmax.f32 %v1725, 0.0
      %v1758 = vmax.f32 %v1726, 0.0
      %v1759 = vmax.f32 %v1727, 0.0
      %v1760 = vmax.f32 %v1728, 0.0
      %v1761 = vmax.f32 %v1729, 0.0
      %v1762 = vmax.f32 %v1730, 0.0
      %v1763 = vmax.f32 %v1731, 0.0
      %v1764 = vmax.f32 %v1732, 0.0
      %v1765 = vmax.f32 %v1733, 0.0
      %v1766 = vmax.f32 %v1734, 0.0
      %v1767 = vmax.f32 %v1735, 0.0
      %v1768 = vmax.f32 %v1736, 0.0
      %v1769 = vmax.f32 %v1737, 0.0
      %v1770 = vmax.f32 %v1738, 0.0
      %v1771 = vmax.f32 %v1739, 0.0
      %v1772 = vmax.f32 %v1740, 0.0
      %v1773 = vmax.f32 %v1741, 0.0
      %v1774 = vmax.f32 %v1742, 0.0
      %v1775 = vmax.f32 %v1743, 0.0
      %v1776 = vmax.f32 %v1744, 0.0
      %v1777 = vmax.f32 %v1745, 0.0
      %v1778 = vmax.f32 %v1746, 0.0
      %v1779 = vmax.f32 %v1747, 0.0
      %v1780 = vpack.c.bf16 %v1749, %v1748
      %v1781 = vpack.c.bf16 %v1751, %v1750
      %v1782 = vpack.c.bf16 %v1753, %v1752
      %v1783 = vpack.c.bf16 %v1755, %v1754
      %v1784 = vpack.c.bf16 %v1757, %v1756
      %v1785 = vpack.c.bf16 %v1759, %v1758
      %v1786 = vpack.c.bf16 %v1761, %v1760
      %v1787 = vpack.c.bf16 %v1763, %v1762
      %v1788 = vpack.c.bf16 %v1765, %v1764
      %v1789 = vpack.c.bf16 %v1767, %v1766
      %v1790 = vpack.c.bf16 %v1769, %v1768
      %v1791 = vpack.c.bf16 %v1771, %v1770
      %v1792 = vpack.c.bf16 %v1773, %v1772
      %v1793 = vpack.c.bf16 %v1775, %v1774
      %v1794 = vpack.c.bf16 %v1777, %v1776
      %v1795 = vpack.c.bf16 %v1779, %v1778
      %v1797 = vshrl.u32 %v1780, 16
      %v1799 = vrot.slane %v1797, 7
      %v1800 = vshll.u32 %v1780, 16
      %v1802 = vor.u32 %v1799, %v1800
      %v1804 = vshrl.u32 %v1781, 16
      %v1806 = vrot.slane %v1804, 7
      %v1807 = vshll.u32 %v1781, 16
      %v1809 = vor.u32 %v1806, %v1807
      %v1811 = vshrl.u32 %v1782, 16
      %v1813 = vrot.slane %v1811, 7
      %v1814 = vshll.u32 %v1782, 16
      %v1816 = vor.u32 %v1813, %v1814
      %v1818 = vshrl.u32 %v1783, 16
      %v1820 = vrot.slane %v1818, 7
      %v1821 = vshll.u32 %v1783, 16
      %v1823 = vor.u32 %v1820, %v1821
      %v1825 = vshrl.u32 %v1784, 16
      %v1827 = vrot.slane %v1825, 7
      %v1828 = vshll.u32 %v1784, 16
      %v1830 = vor.u32 %v1827, %v1828
      %v1832 = vshrl.u32 %v1785, 16
      %v1834 = vrot.slane %v1832, 7
      %v1835 = vshll.u32 %v1785, 16
      %v1837 = vor.u32 %v1834, %v1835
      %v1839 = vshrl.u32 %v1786, 16
      %v1841 = vrot.slane %v1839, 7
      %v1842 = vshll.u32 %v1786, 16
      %v1844 = vor.u32 %v1841, %v1842
      %v1846 = vshrl.u32 %v1787, 16
      %v1848 = vrot.slane %v1846, 7
      %v1849 = vshll.u32 %v1787, 16
      %v1851 = vor.u32 %v1848, %v1849
      %v1853 = vshrl.u32 %v1788, 16
      %v1855 = vrot.slane %v1853, 7
      %v1856 = vshll.u32 %v1788, 16
      %v1858 = vor.u32 %v1855, %v1856
      %v1860 = vshrl.u32 %v1789, 16
      %v1862 = vrot.slane %v1860, 7
      %v1863 = vshll.u32 %v1789, 16
      %v1865 = vor.u32 %v1862, %v1863
      %v1867 = vshrl.u32 %v1790, 16
      %v1869 = vrot.slane %v1867, 7
      %v1870 = vshll.u32 %v1790, 16
      %v1872 = vor.u32 %v1869, %v1870
      %v1874 = vshrl.u32 %v1791, 16
      %v1876 = vrot.slane %v1874, 7
      %v1877 = vshll.u32 %v1791, 16
      %v1879 = vor.u32 %v1876, %v1877
      %v1881 = vshrl.u32 %v1792, 16
      %v1883 = vrot.slane %v1881, 7
      %v1884 = vshll.u32 %v1792, 16
      %v1886 = vor.u32 %v1883, %v1884
      %v1888 = vshrl.u32 %v1793, 16
      %v1890 = vrot.slane %v1888, 7
      %v1891 = vshll.u32 %v1793, 16
      %v1893 = vor.u32 %v1890, %v1891
      %v1895 = vshrl.u32 %v1794, 16
      %v1897 = vrot.slane %v1895, 7
      %v1898 = vshll.u32 %v1794, 16
      %v1900 = vor.u32 %v1897, %v1898
      %v1902 = vshrl.u32 %v1795, 16
      %v1904 = vrot.slane %v1902, 7
      %v1905 = vshll.u32 %v1795, 16
      %v1907 = vor.u32 %v1904, %v1905
      %v1924 = vsel %vm495, 0, %v1802
      %v1925 = vsel %vm495, 0, %v1809
      %v1926 = vsel %vm495, 0, %v1816
      %v1927 = vsel %vm495, 0, %v1823
      %v1928 = vsel %vm495, 0, %v1830
      %v1929 = vsel %vm495, 0, %v1837
      %v1930 = vsel %vm495, 0, %v1844
      %v1931 = vsel %vm495, 0, %v1851
      %v1932 = vsel %vm495, 0, %v1858
      %v1933 = vsel %vm495, 0, %v1865
      %v1934 = vsel %vm495, 0, %v1872
      %v1935 = vsel %vm495, 0, %v1879
      %v1936 = vsel %vm495, 0, %v1886
      %v1937 = vsel %vm495, 0, %v1893
      %v1938 = vsel %vm495, 0, %v1900
      %v1939 = vsel %vm495, 0, %v1907
      %v1940 = vrot.slane %v1800, 1
      %v1941 = vor.u32 %v1797, %v1940
      %v1942 = vrot.slane %v1807, 1
      %v1943 = vor.u32 %v1804, %v1942
      %v1944 = vrot.slane %v1814, 1
      %v1945 = vor.u32 %v1811, %v1944
      %v1946 = vrot.slane %v1821, 1
      %v1947 = vor.u32 %v1818, %v1946
      %v1948 = vrot.slane %v1828, 1
      %v1949 = vor.u32 %v1825, %v1948
      %v1950 = vrot.slane %v1835, 1
      %v1951 = vor.u32 %v1832, %v1950
      %v1952 = vrot.slane %v1842, 1
      %v1953 = vor.u32 %v1839, %v1952
      %v1954 = vrot.slane %v1849, 1
      %v1955 = vor.u32 %v1846, %v1954
      %v1956 = vrot.slane %v1856, 1
      %v1957 = vor.u32 %v1853, %v1956
      %v1958 = vrot.slane %v1863, 1
      %v1959 = vor.u32 %v1860, %v1958
      %v1960 = vrot.slane %v1870, 1
      %v1961 = vor.u32 %v1867, %v1960
      %v1962 = vrot.slane %v1877, 1
      %v1963 = vor.u32 %v1874, %v1962
      %v1964 = vrot.slane %v1884, 1
      %v1965 = vor.u32 %v1881, %v1964
      %v1966 = vrot.slane %v1891, 1
      %v1967 = vor.u32 %v1888, %v1966
      %v1968 = vrot.slane %v1898, 1
      %v1969 = vor.u32 %v1895, %v1968
      %v1970 = vrot.slane %v1905, 1
      %v1971 = vor.u32 %v1902, %v1970
      %v1988 = vsel %vm562, %v1941, 0
      %v1989 = vsel %vm562, %v1943, 0
      %v1990 = vsel %vm562, %v1945, 0
      %v1991 = vsel %vm562, %v1947, 0
      %v1992 = vsel %vm562, %v1949, 0
      %v1993 = vsel %vm562, %v1951, 0
      %v1994 = vsel %vm562, %v1953, 0
      %v1995 = vsel %vm562, %v1955, 0
      %v1996 = vsel %vm562, %v1957, 0
      %v1997 = vsel %vm562, %v1959, 0
      %v1998 = vsel %vm562, %v1961, 0
      %v1999 = vsel %vm562, %v1963, 0
      %v2000 = vsel %vm562, %v1965, 0
      %v2001 = vsel %vm562, %v1967, 0
      %v2002 = vsel %vm562, %v1969, 0
      %v2003 = vsel %vm562, %v1971, 0
      %2020 = vrot.lane.b32.xlu0 %v1780, 8
      %v2021 = vpop.permute.xlu0 %2020
      %2022 = vrot.lane.b32.xlu0 %v1781, 8
      %v2023 = vpop.permute.xlu0 %2022
      %2024 = vrot.lane.b32.xlu0 %v1782, 8
      %v2025 = vpop.permute.xlu0 %2024
      %2026 = vrot.lane.b32.xlu0 %v1783, 8
      %v2027 = vpop.permute.xlu0 %2026
      %2028 = vrot.lane.b32.xlu0 %v1784, 8
      %v2029 = vpop.permute.xlu0 %2028
      %2030 = vrot.lane.b32.xlu0 %v1785, 8
      %v2031 = vpop.permute.xlu0 %2030
      %2032 = vrot.lane.b32.xlu0 %v1786, 8
      %v2033 = vpop.permute.xlu0 %2032
      %2034 = vrot.lane.b32.xlu0 %v1787, 8
      %v2035 = vpop.permute.xlu0 %2034
      %2036 = vrot.lane.b32.xlu0 %v1788, 8
      %v2037 = vpop.permute.xlu0 %2036
      %2038 = vrot.lane.b32.xlu0 %v1789, 8
      %v2039 = vpop.permute.xlu0 %2038
      %2040 = vrot.lane.b32.xlu0 %v1790, 8
      %v2041 = vpop.permute.xlu0 %2040
      %2042 = vrot.lane.b32.xlu0 %v1791, 8
      %v2043 = vpop.permute.xlu0 %2042
      %2044 = vrot.lane.b32.xlu0 %v1792, 8
      %v2045 = vpop.permute.xlu0 %2044
      %2046 = vrot.lane.b32.xlu0 %v1793, 8
      %v2047 = vpop.permute.xlu0 %2046
      %2048 = vrot.lane.b32.xlu0 %v1794, 8
      %v2049 = vpop.permute.xlu0 %2048
      %2050 = vrot.lane.b32.xlu0 %v1795, 8
      %v2051 = vpop.permute.xlu0 %2050
      %2068 = vrot.lane.b32.xlu0 %v1988, 16
      %v2069 = vpop.permute.xlu0 %2068
      %2070 = vrot.lane.b32.xlu0 %v1989, 16
      %v2071 = vpop.permute.xlu0 %2070
      %2072 = vrot.lane.b32.xlu0 %v1990, 16
      %v2073 = vpop.permute.xlu0 %2072
      %2074 = vrot.lane.b32.xlu0 %v1991, 16
      %v2075 = vpop.permute.xlu0 %2074
      %2076 = vrot.lane.b32.xlu0 %v1992, 16
      %v2077 = vpop.permute.xlu0 %2076
      %2078 = vrot.lane.b32.xlu0 %v1993, 16
      %v2079 = vpop.permute.xlu0 %2078
      %2080 = vrot.lane.b32.xlu0 %v1994, 16
      %v2081 = vpop.permute.xlu0 %2080
      %2082 = vrot.lane.b32.xlu0 %v1995, 16
      %v2083 = vpop.permute.xlu0 %2082
      %2084 = vrot.lane.b32.xlu0 %v1996, 16
      %v2085 = vpop.permute.xlu0 %2084
      %2086 = vrot.lane.b32.xlu0 %v1997, 16
      %v2087 = vpop.permute.xlu0 %2086
      %2088 = vrot.lane.b32.xlu0 %v1998, 16
      %v2089 = vpop.permute.xlu0 %2088
      %2090 = vrot.lane.b32.xlu0 %v1999, 16
      %v2091 = vpop.permute.xlu0 %2090
      %2092 = vrot.lane.b32.xlu0 %v2000, 16
      %v2093 = vpop.permute.xlu0 %2092
      %2094 = vrot.lane.b32.xlu0 %v2001, 16
      %v2095 = vpop.permute.xlu0 %2094
      %2096 = vrot.lane.b32.xlu0 %v2002, 16
      %v2097 = vpop.permute.xlu0 %2096
      %2098 = vrot.lane.b32.xlu0 %v2003, 16
      %v2099 = vpop.permute.xlu0 %2098
      %v2102 = vsel %vm659, %v1924, %v2021
      %v2105 = vsel %vm659, %v1925, %v2023
      %v2108 = vsel %vm659, %v1926, %v2025
      %v2111 = vsel %vm659, %v1927, %v2027
      %v2114 = vsel %vm659, %v1928, %v2029
      %v2117 = vsel %vm659, %v1929, %v2031
      %v2120 = vsel %vm659, %v1930, %v2033
      %v2123 = vsel %vm659, %v1931, %v2035
      %v2126 = vsel %vm659, %v1932, %v2037
      %v2129 = vsel %vm659, %v1933, %v2039
      %v2132 = vsel %vm659, %v1934, %v2041
      %v2135 = vsel %vm659, %v1935, %v2043
      %v2138 = vsel %vm659, %v1936, %v2045
      %v2141 = vsel %vm659, %v1937, %v2047
      %v2144 = vsel %vm659, %v1938, %v2049
      %v2147 = vsel %vm659, %v1939, %v2051
      %v2149 = vsel %vm708, %v2102, %v2069
      %v2152 = vsel %vm708, %v2105, %v2071
      %v2155 = vsel %vm708, %v2108, %v2073
      %v2158 = vsel %vm708, %v2111, %v2075
      %v2161 = vsel %vm708, %v2114, %v2077
      %v2164 = vsel %vm708, %v2117, %v2079
      %v2167 = vsel %vm708, %v2120, %v2081
      %v2170 = vsel %vm708, %v2123, %v2083
      %v2173 = vsel %vm708, %v2126, %v2085
      %v2176 = vsel %vm708, %v2129, %v2087
      %v2179 = vsel %vm708, %v2132, %v2089
      %v2182 = vsel %vm708, %v2135, %v2091
      %v2185 = vsel %vm708, %v2138, %v2093
      %v2188 = vsel %vm708, %v2141, %v2095
      %v2191 = vsel %vm708, %v2144, %v2097
      %v2194 = vsel %vm708, %v2147, %v2099
      %2196 = vst.msk [vmem:[#allocation3] sm:$0xff] %vm757, 0
      %2197 = vst.msk [vmem:[#allocation3 + $0x8] sm:$0xff] %vm757, %v2149
      %2198 = vst.msk [vmem:[#allocation3 + $0x10] sm:$0xff] %vm757, %v2152
      %2199 = vst.msk [vmem:[#allocation3 + $0x18] sm:$0xff] %vm757, %v2155
      %2200 = vst.msk [vmem:[#allocation3 + $0x20] sm:$0xff] %vm757, %v2158
      %2201 = vst.msk [vmem:[#allocation3 + $0x28] sm:$0xff] %vm757, %v2161
      %2202 = vst.msk [vmem:[#allocation3 + $0x30] sm:$0xff] %vm757, %v2164
      %2203 = vst.msk [vmem:[#allocation3 + $0x38] sm:$0xff] %vm757, %v2167
      %2204 = vst.msk [vmem:[#allocation3 + $0x40] sm:$0xff] %vm757, %v2170
      %2205 = vst.msk [vmem:[#allocation3 + $0x48] sm:$0xff] %vm757, %v2173
      %2206 = vst.msk [vmem:[#allocation3 + $0x50] sm:$0xff] %vm757, %v2176
      %2207 = vst.msk [vmem:[#allocation3 + $0x58] sm:$0xff] %vm757, %v2179
      %2208 = vst.msk [vmem:[#allocation3 + $0x60] sm:$0xff] %vm757, %v2182
      %2209 = vst.msk [vmem:[#allocation3 + $0x68] sm:$0xff] %vm757, %v2185
      %2210 = vst.msk [vmem:[#allocation3 + $0x70] sm:$0xff] %vm757, %v2188
      %2211 = vst.msk [vmem:[#allocation3 + $0x78] sm:$0xff] %vm757, %v2191
      %2212 = vst.msk [vmem:[#allocation3 + $0x80] sm:$0xff] %vm757, %v2194
      %2213 = vst.msk [vmem:[#allocation3 + $0x88] sm:$0xff] %vm757, 0
      %v2214 = vld [vmem:[#allocation3] sm:$0xff]
      %v2215 = vld [vmem:[#allocation3 + $0x8] sm:$0xff]
      %v2216 = vld [vmem:[#allocation3 + $0x10] sm:$0xff]
      %v2217 = vld [vmem:[#allocation3 + $0x18] sm:$0xff]
      %v2218 = vld [vmem:[#allocation3 + $0x20] sm:$0xff]
      %v2219 = vld [vmem:[#allocation3 + $0x28] sm:$0xff]
      %v2220 = vld [vmem:[#allocation3 + $0x30] sm:$0xff]
      %v2221 = vld [vmem:[#allocation3 + $0x38] sm:$0xff]
      %v2222 = vld [vmem:[#allocation3 + $0x40] sm:$0xff]
      %v2223 = vld [vmem:[#allocation3 + $0x48] sm:$0xff]
      %v2224 = vld [vmem:[#allocation3 + $0x50] sm:$0xff]
      %v2225 = vld [vmem:[#allocation3 + $0x58] sm:$0xff]
      %v2226 = vld [vmem:[#allocation3 + $0x60] sm:$0xff]
      %v2227 = vld [vmem:[#allocation3 + $0x68] sm:$0xff]
      %v2228 = vld [vmem:[#allocation3 + $0x70] sm:$0xff]
      %v2229 = vld [vmem:[#allocation3 + $0x78] sm:$0xff]
      %v2230 = vld [vmem:[%s3] sm:$0xf]
      %v2231 = vld [vmem:[%s3 + $0x4] sm:$0xf]
      %v2232 = vld [vmem:[%s3 + $0x8] sm:$0xf]
      %s2233 = scalar_lea.vmem [#allocation3], 8
      %v2234 = vld [vmem:[%s2233] sm:$0xff]
      %v2235 = vld [vmem:[%s2233 + $0x8] sm:$0xff]
      %v2236 = vld [vmem:[%s2233 + $0x10] sm:$0xff]
      %v2237 = vld [vmem:[%s2233 + $0x18] sm:$0xff]
      %v2238 = vld [vmem:[%s2233 + $0x20] sm:$0xff]
      %v2239 = vld [vmem:[%s2233 + $0x28] sm:$0xff]
      %v2240 = vld [vmem:[%s2233 + $0x30] sm:$0xff]
      %v2241 = vld [vmem:[%s2233 + $0x38] sm:$0xff]
      %v2242 = vld [vmem:[%s2233 + $0x40] sm:$0xff]
      %v2243 = vld [vmem:[%s2233 + $0x48] sm:$0xff]
      %v2244 = vld [vmem:[%s2233 + $0x50] sm:$0xff]
      %v2245 = vld [vmem:[%s2233 + $0x58] sm:$0xff]
      %v2246 = vld [vmem:[%s2233 + $0x60] sm:$0xff]
      %v2247 = vld [vmem:[%s2233 + $0x68] sm:$0xff]
      %v2248 = vld [vmem:[%s2233 + $0x70] sm:$0xff]
      %v2249 = vld [vmem:[%s2233 + $0x78] sm:$0xff]
      %s2250 = scalar_lea.vmem %s3, 12
      %v2251 = vld [vmem:[%s2250] sm:$0xf]
      %v2252 = vld [vmem:[%s2250 + $0x4] sm:$0xf]
      %v2253 = vld [vmem:[%s2250 + $0x8] sm:$0xf]
      %v2257 = vunpack.c.l.b16 %v2251
      %v2258 = vunpack.c.l.b16 %v2252
      %v2259 = vunpack.c.l.b16 %v2253
      %v2260 = vpack.c.b16 %v2258, %v2257
      %v2261 = vpack.c.b16 %v2259, %v2259
      %v2264 = vsel %vm757, %v2234, 0
      %v2267 = vsel %vm757, %v2235, 0
      %v2270 = vsel %vm757, %v2236, 0
      %v2273 = vsel %vm757, %v2237, 0
      %v2276 = vsel %vm757, %v2238, 0
      %v2279 = vsel %vm757, %v2239, 0
      %v2282 = vsel %vm757, %v2240, 0
      %v2285 = vsel %vm757, %v2241, 0
      %v2288 = vsel %vm757, %v2242, 0
      %v2291 = vsel %vm757, %v2243, 0
      %v2294 = vsel %vm757, %v2244, 0
      %v2297 = vsel %vm757, %v2245, 0
      %v2300 = vsel %vm757, %v2246, 0
      %v2303 = vsel %vm757, %v2247, 0
      %v2306 = vsel %vm757, %v2248, 0
      %v2309 = vsel %vm757, %v2249, 0
      %v2312 = vsel %vm873, %v2261, 0
      %2314 = vmatprep.subr.bf16.mxu0 0
      %2315 = vmatpush1.bf16.msra.mxu0 %v2260
      %2316 = vmatprep.subr.bf16.mxu0 0
      %2317 = vmatpush1.bf16.msra.mxu0 %v2312
      %2318 = vmatprep.subr.bf16.mxu0 0
      %2319 = vmatpush1.bf16.msra.mxu0 0
      %2320 = vmatprep.subr.bf16.mxu0 0
      %2321 = vmatpush1.bf16.msra.mxu0 0
      %2322 = vmatprep.subr.bf16.mxu0 0
      %2323 = vmatpush1.bf16.msra.mxu0 0
      %2324 = vmatprep.subr.bf16.mxu0 0
      %2325 = vmatpush1.bf16.msra.mxu0 0
      %2326 = vmatprep.subr.bf16.mxu0 0
      %2327 = vmatpush1.bf16.msra.mxu0 0
      %2328 = vmatprep.subr.bf16.mxu0 0
      %2329 = vmatpush1.bf16.msra.mxu0 0
      %2330 = vmatprep.subr.bf16.mxu0 0
      %2331 = vmatpush1.bf16.msra.mxu0 0
      %2332 = vmatprep.subr.bf16.mxu0 0
      %2333 = vmatpush1.bf16.msra.mxu0 0
      %2334 = vmatprep.subr.bf16.mxu0 0
      %2335 = vmatpush1.bf16.msra.mxu0 0
      %2336 = vmatprep.subr.bf16.mxu0 0
      %2337 = vmatpush1.bf16.msra.mxu0 0
      %2338 = vmatprep.subr.bf16.mxu0 0
      %2339 = vmatpush1.bf16.msra.mxu0 0
      %2340 = vmatprep.subr.bf16.mxu0 0
      %2341 = vmatpush1.bf16.msra.mxu0 0
      %2342 = vmatprep.subr.bf16.mxu0 0
      %2343 = vmatpush1.bf16.msra.mxu0 0
      %2344 = vmatprep.subr.bf16.mxu0 0
      %2345 = vmatpush1.bf16.msra.mxu0 0
      %2346 = vmatprep.mubr.bf16.mxu0 0
      %2347 = vmatmul.mubr.bf16.gmra.mrb[0].mxu0 %v2264
      %v2348 = vpop.f32.mrb[0].mxu0
      %v2349 = vadd.f32 0.0, %v2348
      %v2350 = vpop.f32.mrb[0].mxu0
      %v2351 = vpop.f32.mrb[0].mxu0
      %v2352 = vadd.f32 0.0, %v2351
      %v2353 = vpop.f32.mrb[0].mxu0
      %2354 = vmatprep.mubr.bf16.mxu0 0
      %2355 = vmatmul.mubr.bf16.gmra.mrb[0].mxu0 %v2267
      %v2356 = vpop.f32.mrb[0].mxu0
      %v2357 = vadd.f32 0.0, %v2356
      %v2358 = vpop.f32.mrb[0].mxu0
      %v2359 = vpop.f32.mrb[0].mxu0
      %v2360 = vadd.f32 0.0, %v2359
      %v2361 = vpop.f32.mrb[0].mxu0
      %2362 = vmatprep.mubr.bf16.mxu0 0
      %2363 = vmatmul.mubr.bf16.gmra.mrb[0].mxu0 %v2270
      %v2364 = vpop.f32.mrb[0].mxu0
      %v2365 = vadd.f32 0.0, %v2364
      %v2366 = vpop.f32.mrb[0].mxu0
      %v2367 = vpop.f32.mrb[0].mxu0
      %v2368 = vadd.f32 0.0, %v2367
      %v2369 = vpop.f32.mrb[0].mxu0
      %2370 = vmatprep.mubr.bf16.mxu0 0
      %2371 = vmatmul.mubr.bf16.gmra.mrb[0].mxu0 %v2273
      %v2372 = vpop.f32.mrb[0].mxu0
      %v2373 = vadd.f32 0.0, %v2372
      %v2374 = vpop.f32.mrb[0].mxu0
      %v2375 = vpop.f32.mrb[0].mxu0
      %v2376 = vadd.f32 0.0, %v2375
      %v2377 = vpop.f32.mrb[0].mxu0
      %2378 = vmatprep.mubr.bf16.mxu0 0
      %2379 = vmatmul.mubr.bf16.gmra.mrb[0].mxu0 %v2276
      %v2380 = vpop.f32.mrb[0].mxu0
      %v2381 = vadd.f32 0.0, %v2380
      %v2382 = vpop.f32.mrb[0].mxu0
      %v2383 = vpop.f32.mrb[0].mxu0
      %v2384 = vadd.f32 0.0, %v2383
      %v2385 = vpop.f32.mrb[0].mxu0
      %2386 = vmatprep.mubr.bf16.mxu0 0
      %2387 = vmatmul.mubr.bf16.gmra.mrb[0].mxu0 %v2279
      %v2388 = vpop.f32.mrb[0].mxu0
      %v2389 = vadd.f32 0.0, %v2388
      %v2390 = vpop.f32.mrb[0].mxu0
      %v2391 = vpop.f32.mrb[0].mxu0
      %v2392 = vadd.f32 0.0, %v2391
      %v2393 = vpop.f32.mrb[0].mxu0
      %2394 = vmatprep.mubr.bf16.mxu0 0
      %2395 = vmatmul.mubr.bf16.gmra.mrb[0].mxu0 %v2282
      %v2396 = vpop.f32.mrb[0].mxu0
      %v2397 = vadd.f32 0.0, %v2396
      %v2398 = vpop.f32.mrb[0].mxu0
      %v2399 = vpop.f32.mrb[0].mxu0
      %v2400 = vadd.f32 0.0, %v2399
      %v2401 = vpop.f32.mrb[0].mxu0
      %2402 = vmatprep.mubr.bf16.mxu0 0
      %2403 = vmatmul.mubr.bf16.gmra.mrb[0].mxu0 %v2285
      %v2404 = vpop.f32.mrb[0].mxu0
      %v2405 = vadd.f32 0.0, %v2404
      %v2406 = vpop.f32.mrb[0].mxu0
      %v2407 = vpop.f32.mrb[0].mxu0
      %v2408 = vadd.f32 0.0, %v2407
      %v2409 = vpop.f32.mrb[0].mxu0
      %2410 = vmatprep.mubr.bf16.mxu0 0
      %2411 = vmatmul.mubr.bf16.gmra.mrb[0].mxu0 %v2288
      %v2412 = vpop.f32.mrb[0].mxu0
      %v2413 = vadd.f32 0.0, %v2412
      %v2414 = vpop.f32.mrb[0].mxu0
      %v2415 = vpop.f32.mrb[0].mxu0
      %v2416 = vadd.f32 0.0, %v2415
      %v2417 = vpop.f32.mrb[0].mxu0
      %2418 = vmatprep.mubr.bf16.mxu0 0
      %2419 = vmatmul.mubr.bf16.gmra.mrb[0].mxu0 %v2291
      %v2420 = vpop.f32.mrb[0].mxu0
      %v2421 = vadd.f32 0.0, %v2420
      %v2422 = vpop.f32.mrb[0].mxu0
      %v2423 = vpop.f32.mrb[0].mxu0
      %v2424 = vadd.f32 0.0, %v2423
      %v2425 = vpop.f32.mrb[0].mxu0
      %2426 = vmatprep.mubr.bf16.mxu0 0
      %2427 = vmatmul.mubr.bf16.gmra.mrb[0].mxu0 %v2294
      %v2428 = vpop.f32.mrb[0].mxu0
      %v2429 = vadd.f32 0.0, %v2428
      %v2430 = vpop.f32.mrb[0].mxu0
      %v2431 = vpop.f32.mrb[0].mxu0
      %v2432 = vadd.f32 0.0, %v2431
      %v2433 = vpop.f32.mrb[0].mxu0
      %2434 = vmatprep.mubr.bf16.mxu0 0
      %2435 = vmatmul.mubr.bf16.gmra.mrb[0].mxu0 %v2297
      %v2436 = vpop.f32.mrb[0].mxu0
      %v2437 = vadd.f32 0.0, %v2436
      %v2438 = vpop.f32.mrb[0].mxu0
      %v2439 = vpop.f32.mrb[0].mxu0
      %v2440 = vadd.f32 0.0, %v2439
      %v2441 = vpop.f32.mrb[0].mxu0
      %2442 = vmatprep.mubr.bf16.mxu0 0
      %2443 = vmatmul.mubr.bf16.gmra.mrb[0].mxu0 %v2300
      %v2444 = vpop.f32.mrb[0].mxu0
      %v2445 = vadd.f32 0.0, %v2444
      %v2446 = vpop.f32.mrb[0].mxu0
      %v2447 = vpop.f32.mrb[0].mxu0
      %v2448 = vadd.f32 0.0, %v2447
      %v2449 = vpop.f32.mrb[0].mxu0
      %2450 = vmatprep.mubr.bf16.mxu0 0
      %2451 = vmatmul.mubr.bf16.gmra.mrb[0].mxu0 %v2303
      %v2452 = vpop.f32.mrb[0].mxu0
      %v2453 = vadd.f32 0.0, %v2452
      %v2454 = vpop.f32.mrb[0].mxu0
      %v2455 = vpop.f32.mrb[0].mxu0
      %v2456 = vadd.f32 0.0, %v2455
      %v2457 = vpop.f32.mrb[0].mxu0
      %2458 = vmatprep.mubr.bf16.mxu0 0
      %2459 = vmatmul.mubr.bf16.gmra.mrb[0].mxu0 %v2306
      %v2460 = vpop.f32.mrb[0].mxu0
      %v2461 = vadd.f32 0.0, %v2460
      %v2462 = vpop.f32.mrb[0].mxu0
      %v2463 = vpop.f32.mrb[0].mxu0
      %v2464 = vadd.f32 0.0, %v2463
      %v2465 = vpop.f32.mrb[0].mxu0
      %2466 = vmatprep.mubr.bf16.mxu0 0
      %2467 = vmatmul.mubr.bf16.gmra.mrb[0].mxu0 %v2309
      %v2468 = vpop.f32.mrb[0].mxu0
      %v2469 = vadd.f32 0.0, %v2468
      %v2470 = vpop.f32.mrb[0].mxu0
      %v2471 = vpop.f32.mrb[0].mxu0
      %v2472 = vadd.f32 0.0, %v2471
      %v2473 = vpop.f32.mrb[0].mxu0
      %2474 = vdwg.mxu0
      %v2478 = vunpack.c.l.b16 %v2230
      %v2479 = vunpack.c.l.b16 %v2231
      %v2480 = vunpack.c.l.b16 %v2232
      %v2481 = vpack.c.b16 %v2479, %v2478
      %v2482 = vpack.c.b16 %v2480, %v2480
      %v2485 = vsel %vm757, %v2214, 0
      %v2488 = vsel %vm757, %v2215, 0
      %v2491 = vsel %vm757, %v2216, 0
      %v2494 = vsel %vm757, %v2217, 0
      %v2497 = vsel %vm757, %v2218, 0
      %v2500 = vsel %vm757, %v2219, 0
      %v2503 = vsel %vm757, %v2220, 0
      %v2506 = vsel %vm757, %v2221, 0
      %v2509 = vsel %vm757, %v2222, 0
      %v2512 = vsel %vm757, %v2223, 0
      %v2515 = vsel %vm757, %v2224, 0
      %v2518 = vsel %vm757, %v2225, 0
      %v2521 = vsel %vm757, %v2226, 0
      %v2524 = vsel %vm757, %v2227, 0
      %v2527 = vsel %vm757, %v2228, 0
      %v2530 = vsel %vm757, %v2229, 0
      %v2533 = vsel %vm873, %v2482, 0
      %2535 = vmatprep.subr.bf16.mxu0 0
      %2536 = vmatpush1.bf16.msra.mxu0 %v2481
      %2537 = vmatprep.subr.bf16.mxu0 0
      %2538 = vmatpush1.bf16.msra.mxu0 %v2533
      %2539 = vmatprep.subr.bf16.mxu0 0
      %2540 = vmatpush1.bf16.msra.mxu0 0
      %2541 = vmatprep.subr.bf16.mxu0 0
      %2542 = vmatpush1.bf16.msra.mxu0 0
      %2543 = vmatprep.subr.bf16.mxu0 0
      %2544 = vmatpush1.bf16.msra.mxu0 0
      %2545 = vmatprep.subr.bf16.mxu0 0
      %2546 = vmatpush1.bf16.msra.mxu0 0
      %2547 = vmatprep.subr.bf16.mxu0 0
      %2548 = vmatpush1.bf16.msra.mxu0 0
      %2549 = vmatprep.subr.bf16.mxu0 0
      %2550 = vmatpush1.bf16.msra.mxu0 0
      %2551 = vmatprep.subr.bf16.mxu0 0
      %2552 = vmatpush1.bf16.msra.mxu0 0
      %2553 = vmatprep.subr.bf16.mxu0 0
      %2554 = vmatpush1.bf16.msra.mxu0 0
      %2555 = vmatprep.subr.bf16.mxu0 0
      %2556 = vmatpush1.bf16.msra.mxu0 0
      %2557 = vmatprep.subr.bf16.mxu0 0
      %2558 = vmatpush1.bf16.msra.mxu0 0
      %2559 = vmatprep.subr.bf16.mxu0 0
      %2560 = vmatpush1.bf16.msra.mxu0 0
      %2561 = vmatprep.subr.bf16.mxu0 0
      %2562 = vmatpush1.bf16.msra.mxu0 0
      %2563 = vmatprep.subr.bf16.mxu0 0
      %2564 = vmatpush1.bf16.msra.mxu0 0
      %2565 = vmatprep.subr.bf16.mxu0 0
      %2566 = vmatpush1.bf16.msra.mxu0 0
      %2567 = vmatprep.mubr.bf16.mxu0 0
      %2568 = vmatmul.mubr.bf16.gmra.mrb[0].mxu0 %v2485
      %v2569 = vpop.f32.mrb[0].mxu0
      %v2570 = vadd.f32 %v2349, %v2569
      %v2571 = vpop.f32.mrb[0].mxu0
      %v2572 = vpop.f32.mrb[0].mxu0
      %v2573 = vadd.f32 %v2352, %v2572
      %v2574 = vpop.f32.mrb[0].mxu0
      %2575 = vmatprep.mubr.bf16.mxu0 0
      %2576 = vmatmul.mubr.bf16.gmra.mrb[0].mxu0 %v2488
      %v2577 = vpop.f32.mrb[0].mxu0
      %v2578 = vadd.f32 %v2357, %v2577
      %v2579 = vpop.f32.mrb[0].mxu0
      %v2580 = vpop.f32.mrb[0].mxu0
      %v2581 = vadd.f32 %v2360, %v2580
      %v2582 = vpop.f32.mrb[0].mxu0
      %2583 = vmatprep.mubr.bf16.mxu0 0
      %2584 = vmatmul.mubr.bf16.gmra.mrb[0].mxu0 %v2491
      %v2585 = vpop.f32.mrb[0].mxu0
      %v2586 = vadd.f32 %v2365, %v2585
      %v2587 = vpop.f32.mrb[0].mxu0
      %v2588 = vpop.f32.mrb[0].mxu0
      %v2589 = vadd.f32 %v2368, %v2588
      %v2590 = vpop.f32.mrb[0].mxu0
      %2591 = vmatprep.mubr.bf16.mxu0 0
      %2592 = vmatmul.mubr.bf16.gmra.mrb[0].mxu0 %v2494
      %v2593 = vpop.f32.mrb[0].mxu0
      %v2594 = vadd.f32 %v2373, %v2593
      %v2595 = vpop.f32.mrb[0].mxu0
      %v2596 = vpop.f32.mrb[0].mxu0
      %v2597 = vadd.f32 %v2376, %v2596
      %v2598 = vpop.f32.mrb[0].mxu0
      %2599 = vmatprep.mubr.bf16.mxu0 0
      %2600 = vmatmul.mubr.bf16.gmra.mrb[0].mxu0 %v2497
      %v2601 = vpop.f32.mrb[0].mxu0
      %v2602 = vadd.f32 %v2381, %v2601
      %v2603 = vpop.f32.mrb[0].mxu0
      %v2604 = vpop.f32.mrb[0].mxu0
      %v2605 = vadd.f32 %v2384, %v2604
      %v2606 = vpop.f32.mrb[0].mxu0
      %2607 = vmatprep.mubr.bf16.mxu0 0
      %2608 = vmatmul.mubr.bf16.gmra.mrb[0].mxu0 %v2500
      %v2609 = vpop.f32.mrb[0].mxu0
      %v2610 = vadd.f32 %v2389, %v2609
      %v2611 = vpop.f32.mrb[0].mxu0
      %v2612 = vpop.f32.mrb[0].mxu0
      %v2613 = vadd.f32 %v2392, %v2612
      %v2614 = vpop.f32.mrb[0].mxu0
      %2615 = vmatprep.mubr.bf16.mxu0 0
      %2616 = vmatmul.mubr.bf16.gmra.mrb[0].mxu0 %v2503
      %v2617 = vpop.f32.mrb[0].mxu0
      %v2618 = vadd.f32 %v2397, %v2617
      %v2619 = vpop.f32.mrb[0].mxu0
      %v2620 = vpop.f32.mrb[0].mxu0
      %v2621 = vadd.f32 %v2400, %v2620
      %v2622 = vpop.f32.mrb[0].mxu0
      %2623 = vmatprep.mubr.bf16.mxu0 0
      %2624 = vmatmul.mubr.bf16.gmra.mrb[0].mxu0 %v2506
      %v2625 = vpop.f32.mrb[0].mxu0
      %v2626 = vadd.f32 %v2405, %v2625
      %v2627 = vpop.f32.mrb[0].mxu0
      %v2628 = vpop.f32.mrb[0].mxu0
      %v2629 = vadd.f32 %v2408, %v2628
      %v2630 = vpop.f32.mrb[0].mxu0
      %2631 = vmatprep.mubr.bf16.mxu0 0
      %2632 = vmatmul.mubr.bf16.gmra.mrb[0].mxu0 %v2509
      %v2633 = vpop.f32.mrb[0].mxu0
      %v2634 = vadd.f32 %v2413, %v2633
      %v2635 = vpop.f32.mrb[0].mxu0
      %v2636 = vpop.f32.mrb[0].mxu0
      %v2637 = vadd.f32 %v2416, %v2636
      %v2638 = vpop.f32.mrb[0].mxu0
      %2639 = vmatprep.mubr.bf16.mxu0 0
      %2640 = vmatmul.mubr.bf16.gmra.mrb[0].mxu0 %v2512
      %v2641 = vpop.f32.mrb[0].mxu0
      %v2642 = vadd.f32 %v2421, %v2641
      %v2643 = vpop.f32.mrb[0].mxu0
      %v2644 = vpop.f32.mrb[0].mxu0
      %v2645 = vadd.f32 %v2424, %v2644
      %v2646 = vpop.f32.mrb[0].mxu0
      %2647 = vmatprep.mubr.bf16.mxu0 0
      %2648 = vmatmul.mubr.bf16.gmra.mrb[0].mxu0 %v2515
      %v2649 = vpop.f32.mrb[0].mxu0
      %v2650 = vadd.f32 %v2429, %v2649
      %v2651 = vpop.f32.mrb[0].mxu0
      %v2652 = vpop.f32.mrb[0].mxu0
      %v2653 = vadd.f32 %v2432, %v2652
      %v2654 = vpop.f32.mrb[0].mxu0
      %2655 = vmatprep.mubr.bf16.mxu0 0
      %2656 = vmatmul.mubr.bf16.gmra.mrb[0].mxu0 %v2518
      %v2657 = vpop.f32.mrb[0].mxu0
      %v2658 = vadd.f32 %v2437, %v2657
      %v2659 = vpop.f32.mrb[0].mxu0
      %v2660 = vpop.f32.mrb[0].mxu0
      %v2661 = vadd.f32 %v2440, %v2660
      %v2662 = vpop.f32.mrb[0].mxu0
      %2663 = vmatprep.mubr.bf16.mxu0 0
      %2664 = vmatmul.mubr.bf16.gmra.mrb[0].mxu0 %v2521
      %v2665 = vpop.f32.mrb[0].mxu0
      %v2666 = vadd.f32 %v2445, %v2665
      %v2667 = vpop.f32.mrb[0].mxu0
      %v2668 = vpop.f32.mrb[0].mxu0
      %v2669 = vadd.f32 %v2448, %v2668
      %v2670 = vpop.f32.mrb[0].mxu0
      %2671 = vmatprep.mubr.bf16.mxu0 0
      %2672 = vmatmul.mubr.bf16.gmra.mrb[0].mxu0 %v2524
      %v2673 = vpop.f32.mrb[0].mxu0
      %v2674 = vadd.f32 %v2453, %v2673
      %v2675 = vpop.f32.mrb[0].mxu0
      %v2676 = vpop.f32.mrb[0].mxu0
      %v2677 = vadd.f32 %v2456, %v2676
      %v2678 = vpop.f32.mrb[0].mxu0
      %2679 = vmatprep.mubr.bf16.mxu0 0
      %2680 = vmatmul.mubr.bf16.gmra.mrb[0].mxu0 %v2527
      %v2681 = vpop.f32.mrb[0].mxu0
      %v2682 = vadd.f32 %v2461, %v2681
      %v2683 = vpop.f32.mrb[0].mxu0
      %v2684 = vpop.f32.mrb[0].mxu0
      %v2685 = vadd.f32 %v2464, %v2684
      %v2686 = vpop.f32.mrb[0].mxu0
      %2687 = vmatprep.mubr.bf16.mxu0 0
      %2688 = vmatmul.mubr.bf16.gmra.mrb[0].mxu0 %v2530
      %v2689 = vpop.f32.mrb[0].mxu0
      %v2690 = vadd.f32 %v2469, %v2689
      %v2691 = vpop.f32.mrb[0].mxu0
      %v2692 = vpop.f32.mrb[0].mxu0
      %v2693 = vadd.f32 %v2472, %v2692
      %v2694 = vpop.f32.mrb[0].mxu0
      %2695 = vdwg.mxu0
      %s2696 = scalar_lea.vmem [#allocation3], 16
      %v2697 = vld [vmem:[%s2696] sm:$0xff]
      %v2698 = vld [vmem:[%s2696 + $0x8] sm:$0xff]
      %v2699 = vld [vmem:[%s2696 + $0x10] sm:$0xff]
      %v2700 = vld [vmem:[%s2696 + $0x18] sm:$0xff]
      %v2701 = vld [vmem:[%s2696 + $0x20] sm:$0xff]
      %v2702 = vld [vmem:[%s2696 + $0x28] sm:$0xff]
      %v2703 = vld [vmem:[%s2696 + $0x30] sm:$0xff]
      %v2704 = vld [vmem:[%s2696 + $0x38] sm:$0xff]
      %v2705 = vld [vmem:[%s2696 + $0x40] sm:$0xff]
      %v2706 = vld [vmem:[%s2696 + $0x48] sm:$0xff]
      %v2707 = vld [vmem:[%s2696 + $0x50] sm:$0xff]
      %v2708 = vld [vmem:[%s2696 + $0x58] sm:$0xff]
      %v2709 = vld [vmem:[%s2696 + $0x60] sm:$0xff]
      %v2710 = vld [vmem:[%s2696 + $0x68] sm:$0xff]
      %v2711 = vld [vmem:[%s2696 + $0x70] sm:$0xff]
      %v2712 = vld [vmem:[%s2696 + $0x78] sm:$0xff]
      %s2713 = scalar_lea.vmem %s3, 24
      %v2714 = vld [vmem:[%s2713] sm:$0xf]
      %v2715 = vld [vmem:[%s2713 + $0x4] sm:$0xf]
      %v2716 = vld [vmem:[%s2713 + $0x8] sm:$0xf]
      %v2720 = vunpack.c.l.b16 %v2714
      %v2721 = vunpack.c.l.b16 %v2715
      %v2722 = vunpack.c.l.b16 %v2716
      %v2723 = vpack.c.b16 %v2721, %v2720
      %v2724 = vpack.c.b16 %v2722, %v2722
      %v2727 = vsel %vm757, %v2697, 0
      %v2730 = vsel %vm757, %v2698, 0
      %v2733 = vsel %vm757, %v2699, 0
      %v2736 = vsel %vm757, %v2700, 0
      %v2739 = vsel %vm757, %v2701, 0
      %v2742 = vsel %vm757, %v2702, 0
      %v2745 = vsel %vm757, %v2703, 0
      %v2748 = vsel %vm757, %v2704, 0
      %v2751 = vsel %vm757, %v2705, 0
      %v2754 = vsel %vm757, %v2706, 0
      %v2757 = vsel %vm757, %v2707, 0
      %v2760 = vsel %vm757, %v2708, 0
      %v2763 = vsel %vm757, %v2709, 0
      %v2766 = vsel %vm757, %v2710, 0
      %v2769 = vsel %vm757, %v2711, 0
      %v2772 = vsel %vm757, %v2712, 0
      %v2775 = vsel %vm873, %v2724, 0
      %2777 = vmatprep.subr.bf16.mxu0 0
      %2778 = vmatpush1.bf16.msra.mxu0 %v2723
      %2779 = vmatprep.subr.bf16.mxu0 0
      %2780 = vmatpush1.bf16.msra.mxu0 %v2775
      %2781 = vmatprep.subr.bf16.mxu0 0
      %2782 = vmatpush1.bf16.msra.mxu0 0
      %2783 = vmatprep.subr.bf16.mxu0 0
      %2784 = vmatpush1.bf16.msra.mxu0 0
      %2785 = vmatprep.subr.bf16.mxu0 0
      %2786 = vmatpush1.bf16.msra.mxu0 0
      %2787 = vmatprep.subr.bf16.mxu0 0
      %2788 = vmatpush1.bf16.msra.mxu0 0
      %2789 = vmatprep.subr.bf16.mxu0 0
      %2790 = vmatpush1.bf16.msra.mxu0 0
      %2791 = vmatprep.subr.bf16.mxu0 0
      %2792 = vmatpush1.bf16.msra.mxu0 0
      %2793 = vmatprep.subr.bf16.mxu0 0
      %2794 = vmatpush1.bf16.msra.mxu0 0
      %2795 = vmatprep.subr.bf16.mxu0 0
      %2796 = vmatpush1.bf16.msra.mxu0 0
      %2797 = vmatprep.subr.bf16.mxu0 0
      %2798 = vmatpush1.bf16.msra.mxu0 0
      %2799 = vmatprep.subr.bf16.mxu0 0
      %2800 = vmatpush1.bf16.msra.mxu0 0
      %2801 = vmatprep.subr.bf16.mxu0 0
      %2802 = vmatpush1.bf16.msra.mxu0 0
      %2803 = vmatprep.subr.bf16.mxu0 0
      %2804 = vmatpush1.bf16.msra.mxu0 0
      %2805 = vmatprep.subr.bf16.mxu0 0
      %2806 = vmatpush1.bf16.msra.mxu0 0
      %2807 = vmatprep.subr.bf16.mxu0 0
      %2808 = vmatpush1.bf16.msra.mxu0 0
      %2809 = vmatprep.mubr.bf16.mxu0 0
      %2810 = vmatmul.mubr.bf16.gmra.mrb[0].mxu0 %v2727
      %v2811 = vpop.f32.mrb[0].mxu0
      %v2812 = vadd.f32 0.0, %v2811
      %v2813 = vpop.f32.mrb[0].mxu0
      %v2814 = vpop.f32.mrb[0].mxu0
      %v2815 = vadd.f32 0.0, %v2814
      %v2816 = vpop.f32.mrb[0].mxu0
      %2817 = vmatprep.mubr.bf16.mxu0 0
      %2818 = vmatmul.mubr.bf16.gmra.mrb[0].mxu0 %v2730
      %v2819 = vpop.f32.mrb[0].mxu0
      %v2820 = vadd.f32 0.0, %v2819
      %v2821 = vpop.f32.mrb[0].mxu0
      %v2822 = vpop.f32.mrb[0].mxu0
      %v2823 = vadd.f32 0.0, %v2822
      %v2824 = vpop.f32.mrb[0].mxu0
      %2825 = vmatprep.mubr.bf16.mxu0 0
      %2826 = vmatmul.mubr.bf16.gmra.mrb[0].mxu0 %v2733
      %v2827 = vpop.f32.mrb[0].mxu0
      %v2828 = vadd.f32 0.0, %v2827
      %v2829 = vpop.f32.mrb[0].mxu0
      %v2830 = vpop.f32.mrb[0].mxu0
      %v2831 = vadd.f32 0.0, %v2830
      %v2832 = vpop.f32.mrb[0].mxu0
      %2833 = vmatprep.mubr.bf16.mxu0 0
      %2834 = vmatmul.mubr.bf16.gmra.mrb[0].mxu0 %v2736
      %v2835 = vpop.f32.mrb[0].mxu0
      %v2836 = vadd.f32 0.0, %v2835
      %v2837 = vpop.f32.mrb[0].mxu0
      %v2838 = vpop.f32.mrb[0].mxu0
      %v2839 = vadd.f32 0.0, %v2838
      %v2840 = vpop.f32.mrb[0].mxu0
      %2841 = vmatprep.mubr.bf16.mxu0 0
      %2842 = vmatmul.mubr.bf16.gmra.mrb[0].mxu0 %v2739
      %v2843 = vpop.f32.mrb[0].mxu0
      %v2844 = vadd.f32 0.0, %v2843
      %v2845 = vpop.f32.mrb[0].mxu0
      %v2846 = vpop.f32.mrb[0].mxu0
      %v2847 = vadd.f32 0.0, %v2846
      %v2848 = vpop.f32.mrb[0].mxu0
      %2849 = vmatprep.mubr.bf16.mxu0 0
      %2850 = vmatmul.mubr.bf16.gmra.mrb[0].mxu0 %v2742
      %v2851 = vpop.f32.mrb[0].mxu0
      %v2852 = vadd.f32 0.0, %v2851
      %v2853 = vpop.f32.mrb[0].mxu0
      %v2854 = vpop.f32.mrb[0].mxu0
      %v2855 = vadd.f32 0.0, %v2854
      %v2856 = vpop.f32.mrb[0].mxu0
      %2857 = vmatprep.mubr.bf16.mxu0 0
      %2858 = vmatmul.mubr.bf16.gmra.mrb[0].mxu0 %v2745
      %v2859 = vpop.f32.mrb[0].mxu0
      %v2860 = vadd.f32 0.0, %v2859
      %v2861 = vpop.f32.mrb[0].mxu0
      %v2862 = vpop.f32.mrb[0].mxu0
      %v2863 = vadd.f32 0.0, %v2862
      %v2864 = vpop.f32.mrb[0].mxu0
      %2865 = vmatprep.mubr.bf16.mxu0 0
      %2866 = vmatmul.mubr.bf16.gmra.mrb[0].mxu0 %v2748
      %v2867 = vpop.f32.mrb[0].mxu0
      %v2868 = vadd.f32 0.0, %v2867
      %v2869 = vpop.f32.mrb[0].mxu0
      %v2870 = vpop.f32.mrb[0].mxu0
      %v2871 = vadd.f32 0.0, %v2870
      %v2872 = vpop.f32.mrb[0].mxu0
      %2873 = vmatprep.mubr.bf16.mxu0 0
      %2874 = vmatmul.mubr.bf16.gmra.mrb[0].mxu0 %v2751
      %v2875 = vpop.f32.mrb[0].mxu0
      %v2876 = vadd.f32 0.0, %v2875
      %v2877 = vpop.f32.mrb[0].mxu0
      %v2878 = vpop.f32.mrb[0].mxu0
      %v2879 = vadd.f32 0.0, %v2878
      %v2880 = vpop.f32.mrb[0].mxu0
      %2881 = vmatprep.mubr.bf16.mxu0 0
      %2882 = vmatmul.mubr.bf16.gmra.mrb[0].mxu0 %v2754
      %v2883 = vpop.f32.mrb[0].mxu0
      %v2884 = vadd.f32 0.0, %v2883
      %v2885 = vpop.f32.mrb[0].mxu0
      %v2886 = vpop.f32.mrb[0].mxu0
      %v2887 = vadd.f32 0.0, %v2886
      %v2888 = vpop.f32.mrb[0].mxu0
      %2889 = vmatprep.mubr.bf16.mxu0 0
      %2890 = vmatmul.mubr.bf16.gmra.mrb[0].mxu0 %v2757
      %v2891 = vpop.f32.mrb[0].mxu0
      %v2892 = vadd.f32 0.0, %v2891
      %v2893 = vpop.f32.mrb[0].mxu0
      %v2894 = vpop.f32.mrb[0].mxu0
      %v2895 = vadd.f32 0.0, %v2894
      %v2896 = vpop.f32.mrb[0].mxu0
      %2897 = vmatprep.mubr.bf16.mxu0 0
      %2898 = vmatmul.mubr.bf16.gmra.mrb[0].mxu0 %v2760
      %v2899 = vpop.f32.mrb[0].mxu0
      %v2900 = vadd.f32 0.0, %v2899
      %v2901 = vpop.f32.mrb[0].mxu0
      %v2902 = vpop.f32.mrb[0].mxu0
      %v2903 = vadd.f32 0.0, %v2902
      %v2904 = vpop.f32.mrb[0].mxu0
      %2905 = vmatprep.mubr.bf16.mxu0 0
      %2906 = vmatmul.mubr.bf16.gmra.mrb[0].mxu0 %v2763
      %v2907 = vpop.f32.mrb[0].mxu0
      %v2908 = vadd.f32 0.0, %v2907
      %v2909 = vpop.f32.mrb[0].mxu0
      %v2910 = vpop.f32.mrb[0].mxu0
      %v2911 = vadd.f32 0.0, %v2910
      %v2912 = vpop.f32.mrb[0].mxu0
      %2913 = vmatprep.mubr.bf16.mxu0 0
      %2914 = vmatmul.mubr.bf16.gmra.mrb[0].mxu0 %v2766
      %v2915 = vpop.f32.mrb[0].mxu0
      %v2916 = vadd.f32 0.0, %v2915
      %v2917 = vpop.f32.mrb[0].mxu0
      %v2918 = vpop.f32.mrb[0].mxu0
      %v2919 = vadd.f32 0.0, %v2918
      %v2920 = vpop.f32.mrb[0].mxu0
      %2921 = vmatprep.mubr.bf16.mxu0 0
      %2922 = vmatmul.mubr.bf16.gmra.mrb[0].mxu0 %v2769
      %v2923 = vpop.f32.mrb[0].mxu0
      %v2924 = vadd.f32 0.0, %v2923
      %v2925 = vpop.f32.mrb[0].mxu0
      %v2926 = vpop.f32.mrb[0].mxu0
      %v2927 = vadd.f32 0.0, %v2926
      %v2928 = vpop.f32.mrb[0].mxu0
      %2929 = vmatprep.mubr.bf16.mxu0 0
      %2930 = vmatmul.mubr.bf16.gmra.mrb[0].mxu0 %v2772
      %v2931 = vpop.f32.mrb[0].mxu0
      %v2932 = vadd.f32 0.0, %v2931
      %v2933 = vpop.f32.mrb[0].mxu0
      %v2934 = vpop.f32.mrb[0].mxu0
      %v2935 = vadd.f32 0.0, %v2934
      %v2936 = vpop.f32.mrb[0].mxu0
      %2937 = vdwg.mxu0
      %v2938 = vadd.f32 %v2570, %v2812
      %v2939 = vadd.f32 %v2573, %v2815
      %v2940 = vadd.f32 %v2578, %v2820
      %v2941 = vadd.f32 %v2581, %v2823
      %v2942 = vadd.f32 %v2586, %v2828
      %v2943 = vadd.f32 %v2589, %v2831
      %v2944 = vadd.f32 %v2594, %v2836
      %v2945 = vadd.f32 %v2597, %v2839
      %v2946 = vadd.f32 %v2602, %v2844
      %v2947 = vadd.f32 %v2605, %v2847
      %v2948 = vadd.f32 %v2610, %v2852
      %v2949 = vadd.f32 %v2613, %v2855
      %v2950 = vadd.f32 %v2618, %v2860
      %v2951 = vadd.f32 %v2621, %v2863
      %v2952 = vadd.f32 %v2626, %v2868
      %v2953 = vadd.f32 %v2629, %v2871
      %v2954 = vadd.f32 %v2634, %v2876
      %v2955 = vadd.f32 %v2637, %v2879
      %v2956 = vadd.f32 %v2642, %v2884
      %v2957 = vadd.f32 %v2645, %v2887
      %v2958 = vadd.f32 %v2650, %v2892
      %v2959 = vadd.f32 %v2653, %v2895
      %v2960 = vadd.f32 %v2658, %v2900
      %v2961 = vadd.f32 %v2661, %v2903
      %v2962 = vadd.f32 %v2666, %v2908
      %v2963 = vadd.f32 %v2669, %v2911
      %v2964 = vadd.f32 %v2674, %v2916
      %v2965 = vadd.f32 %v2677, %v2919
      %v2966 = vadd.f32 %v2682, %v2924
      %v2967 = vadd.f32 %v2685, %v2927
      %v2968 = vadd.f32 %v2690, %v2932
      %v2969 = vadd.f32 %v2693, %v2935
      %v2970 = vld [vmem:[%s4] sm:$0x1]
      %v2972 = vlaneseq
      %v2973 = vshrl.u32 %v2972, 7
      %v2974 = vsub.s32 0, %v2973
      %v2975 = vrot.slane %v2970, %v2974
      %v2977 = vadd.f32 %v2938, %v2975
      %v2978 = vadd.f32 %v2939, %v2975
      %v2979 = vadd.f32 %v2940, %v2975
      %v2980 = vadd.f32 %v2941, %v2975
      %v2981 = vadd.f32 %v2942, %v2975
      %v2982 = vadd.f32 %v2943, %v2975
      %v2983 = vadd.f32 %v2944, %v2975
      %v2984 = vadd.f32 %v2945, %v2975
      %v2985 = vadd.f32 %v2946, %v2975
      %v2986 = vadd.f32 %v2947, %v2975
      %v2987 = vadd.f32 %v2948, %v2975
      %v2988 = vadd.f32 %v2949, %v2975
      %v2989 = vadd.f32 %v2950, %v2975
      %v2990 = vadd.f32 %v2951, %v2975
      %v2991 = vadd.f32 %v2952, %v2975
      %v2992 = vadd.f32 %v2953, %v2975
      %v2993 = vadd.f32 %v2954, %v2975
      %v2994 = vadd.f32 %v2955, %v2975
      %v2995 = vadd.f32 %v2956, %v2975
      %v2996 = vadd.f32 %v2957, %v2975
      %v2997 = vadd.f32 %v2958, %v2975
      %v2998 = vadd.f32 %v2959, %v2975
      %v2999 = vadd.f32 %v2960, %v2975
      %v3000 = vadd.f32 %v2961, %v2975
      %v3001 = vadd.f32 %v2962, %v2975
      %v3002 = vadd.f32 %v2963, %v2975
      %v3003 = vadd.f32 %v2964, %v2975
      %v3004 = vadd.f32 %v2965, %v2975
      %v3005 = vadd.f32 %v2966, %v2975
      %v3006 = vadd.f32 %v2967, %v2975
      %v3007 = vadd.f32 %v2968, %v2975
      %v3008 = vadd.f32 %v2969, %v2975
      %v3009 = vadd.f32 %v2977, %v1309
      %v3010 = vadd.f32 %v2978, %v1312
      %v3011 = vadd.f32 %v2979, %v1317
      %v3012 = vadd.f32 %v2980, %v1320
      %v3013 = vadd.f32 %v2981, %v1325
      %v3014 = vadd.f32 %v2982, %v1328
      %v3015 = vadd.f32 %v2983, %v1333
      %v3016 = vadd.f32 %v2984, %v1336
      %v3017 = vadd.f32 %v2985, %v1341
      %v3018 = vadd.f32 %v2986, %v1344
      %v3019 = vadd.f32 %v2987, %v1349
      %v3020 = vadd.f32 %v2988, %v1352
      %v3021 = vadd.f32 %v2989, %v1357
      %v3022 = vadd.f32 %v2990, %v1360
      %v3023 = vadd.f32 %v2991, %v1365
      %v3024 = vadd.f32 %v2992, %v1368
      %v3025 = vadd.f32 %v2993, %v1373
      %v3026 = vadd.f32 %v2994, %v1376
      %v3027 = vadd.f32 %v2995, %v1381
      %v3028 = vadd.f32 %v2996, %v1384
      %v3029 = vadd.f32 %v2997, %v1389
      %v3030 = vadd.f32 %v2998, %v1392
      %v3031 = vadd.f32 %v2999, %v1397
      %v3032 = vadd.f32 %v3000, %v1400
      %v3033 = vadd.f32 %v3001, %v1405
      %v3034 = vadd.f32 %v3002, %v1408
      %v3035 = vadd.f32 %v3003, %v1413
      %v3036 = vadd.f32 %v3004, %v1416
      %v3037 = vadd.f32 %v3005, %v1421
      %v3038 = vadd.f32 %v3006, %v1424
      %v3039 = vadd.f32 %v3007, %v1429
      %v3040 = vadd.f32 %v3008, %v1432
      %v3041 = vmax.f32 %v3009, 0.0
      %v3042 = vmax.f32 %v3010, 0.0
      %v3043 = vmax.f32 %v3011, 0.0
      %v3044 = vmax.f32 %v3012, 0.0
      %v3045 = vmax.f32 %v3013, 0.0
      %v3046 = vmax.f32 %v3014, 0.0
      %v3047 = vmax.f32 %v3015, 0.0
      %v3048 = vmax.f32 %v3016, 0.0
      %v3049 = vmax.f32 %v3017, 0.0
      %v3050 = vmax.f32 %v3018, 0.0
      %v3051 = vmax.f32 %v3019, 0.0
      %v3052 = vmax.f32 %v3020, 0.0
      %v3053 = vmax.f32 %v3021, 0.0
      %v3054 = vmax.f32 %v3022, 0.0
      %v3055 = vmax.f32 %v3023, 0.0
      %v3056 = vmax.f32 %v3024, 0.0
      %v3057 = vmax.f32 %v3025, 0.0
      %v3058 = vmax.f32 %v3026, 0.0
      %v3059 = vmax.f32 %v3027, 0.0
      %v3060 = vmax.f32 %v3028, 0.0
      %v3061 = vmax.f32 %v3029, 0.0
      %v3062 = vmax.f32 %v3030, 0.0
      %v3063 = vmax.f32 %v3031, 0.0
      %v3064 = vmax.f32 %v3032, 0.0
      %v3065 = vmax.f32 %v3033, 0.0
      %v3066 = vmax.f32 %v3034, 0.0
      %v3067 = vmax.f32 %v3035, 0.0
      %v3068 = vmax.f32 %v3036, 0.0
      %v3069 = vmax.f32 %v3037, 0.0
      %v3070 = vmax.f32 %v3038, 0.0
      %v3071 = vmax.f32 %v3039, 0.0
      %v3072 = vmax.f32 %v3040, 0.0
      %3073 = vst.msk [vmem:[%s251] sm:$0xff] %vm659, %v3041
      %3074 = vst.msk [vmem:[%s251 + $0x8] sm:$0xff] %vm659, %v3042
      %3075 = vst.msk [vmem:[%s251 + $0x10] sm:$0xff] %vm659, %v3043
      %3076 = vst.msk [vmem:[%s251 + $0x18] sm:$0xff] %vm659, %v3044
      %3077 = vst.msk [vmem:[%s251 + $0x20] sm:$0xff] %vm659, %v3045
      %3078 = vst.msk [vmem:[%s251 + $0x28] sm:$0xff] %vm659, %v3046
      %3079 = vst.msk [vmem:[%s251 + $0x30] sm:$0xff] %vm659, %v3047
      %3080 = vst.msk [vmem:[%s251 + $0x38] sm:$0xff] %vm659, %v3048
      %3081 = vst.msk [vmem:[%s251 + $0x40] sm:$0xff] %vm659, %v3049
      %3082 = vst.msk [vmem:[%s251 + $0x48] sm:$0xff] %vm659, %v3050
      %3083 = vst.msk [vmem:[%s251 + $0x50] sm:$0xff] %vm659, %v3051
      %3084 = vst.msk [vmem:[%s251 + $0x58] sm:$0xff] %vm659, %v3052
      %3085 = vst.msk [vmem:[%s251 + $0x60] sm:$0xff] %vm659, %v3053
      %3086 = vst.msk [vmem:[%s251 + $0x68] sm:$0xff] %vm659, %v3054
      %3087 = vst.msk [vmem:[%s251 + $0x70] sm:$0xff] %vm659, %v3055
      %3088 = vst.msk [vmem:[%s251 + $0x78] sm:$0xff] %vm659, %v3056
      %3089 = vst.msk [vmem:[%s251 + $0x80] sm:$0xff] %vm659, %v3057
      %3090 = vst.msk [vmem:[%s251 + $0x88] sm:$0xff] %vm659, %v3058
      %3091 = vst.msk [vmem:[%s251 + $0x90] sm:$0xff] %vm659, %v3059
      %3092 = vst.msk [vmem:[%s251 + $0x98] sm:$0xff] %vm659, %v3060
      %3093 = vst.msk [vmem:[%s251 + $0xa0] sm:$0xff] %vm659, %v3061
      %3094 = vst.msk [vmem:[%s251 + $0xa8] sm:$0xff] %vm659, %v3062
      %3095 = vst.msk [vmem:[%s251 + $0xb0] sm:$0xff] %vm659, %v3063
      %3096 = vst.msk [vmem:[%s251 + $0xb8] sm:$0xff] %vm659, %v3064
      %3097 = vst.msk [vmem:[%s251 + $0xc0] sm:$0xff] %vm659, %v3065
      %3098 = vst.msk [vmem:[%s251 + $0xc8] sm:$0xff] %vm659, %v3066
      %3099 = vst.msk [vmem:[%s251 + $0xd0] sm:$0xff] %vm659, %v3067
      %3100 = vst.msk [vmem:[%s251 + $0xd8] sm:$0xff] %vm659, %v3068
      %3101 = vst.msk [vmem:[%s251 + $0xe0] sm:$0xff] %vm659, %v3069
      %3102 = vst.msk [vmem:[%s251 + $0xe8] sm:$0xff] %vm659, %v3070
      %3103 = vst.msk [vmem:[%s251 + $0xf0] sm:$0xff] %vm659, %v3071
      %3104 = vst.msk [vmem:[%s251 + $0xf8] sm:$0xff] %vm659, %v3072
      %p3105 = scmp.lt.s32.totalorder %s17, 1
      %s3106 = scalar_select %p3105, %s17, 1
      %s3107 = smul.addr %s3106, 32
      %s3108 = smul.addr %s3107, 8
      %s3109 = scalar_lea.vmem %s6, %s3108
      // Predicated region
      $region45: #{residual_block_forward.1} parent=43 // pred_check
        %p3110 = pneg %p166
      $region46: #{residual_block_forward.1} parent=43 // pred_check_branch
        %3112 = sbr.rel (%p3110) target = $region48
      $region47: #{residual_block_forward.1} parent=43 // pred_region
        _
      $region48: #{residual_block_forward.1} parent=43 // pred_fallthru
        _
    $region44: #{residual_block_forward.1} parent=5 // pred_fallthru
      _
    %p3113 = scmp.le.s32.totalorder 2, %s12
    // Predicated region
    $region49: #{residual_block_forward.1} parent=5 // pred_check
      %p3114 = pneg %p3113
    $region50: #{residual_block_forward.1} parent=5 // pred_check_branch
      %3116 = sbr.rel (%p3114) target = $region52
    $region51: #{residual_block_forward.1} parent=5 // pred_region
      %s3117 = ssub.s32 %s12, 2
      // Predicated region
      $region53: #{residual_block_forward.1} parent=51 // pred_check
        %p3118 = pneg %p172
      $region54: #{residual_block_forward.1} parent=51 // pred_check_branch
        %3120 = sbr.rel (%p3118) target = $region56
      $region55: #{residual_block_forward.1} parent=51 // pred_region
        %p3121 = scmp.lt.s32.totalorder %s18, 1
        %s3122 = scalar_select %p3121, %s18, 1
        %s3123 = smul.addr %s3122, 32
        %s3124 = smul.addr %s3123, 8
        %s3125 = scalar_lea.vmem %s6, %s3124
      $region56: #{residual_block_forward.1} parent=51 // pred_fallthru
        _
    $region52: #{residual_block_forward.1} parent=5 // pred_fallthru
      _
  $region6: #{residual_block_forward.1} parent=0 // loop_footer
    %s16 = sadd.s32 1, %s12
  $region7: #{residual_block_forward.1} parent=0 // loop_footer_branch
    %11 = sbr.rel target = $region3
  $region8: #{residual_block_forward.1} parent=0 // loop_exit
    _

</llo_original>
